<compile_context>
chip_gen: v5e
topology: v5e:2x2
jax: 0.10.0
libtpu: 0.0.40
codegen_flags: <defaults>
</compile_context>

<pallas_src>
import functools

import jax
import jax.numpy as jnp
import numpy as np
from jax.experimental import pallas as pl
from jax.experimental.pallas import tpu as pltpu


def _encoder_layer_kernel(x_ref,
                          wq_ref, bq_ref, wk_ref, bk_ref, wv_ref, bv_ref,
                          wo_ref, bo_ref,
                          w1_ref, b1_ref, w2_ref, b2_ref,
                          g1_ref, be1_ref, g2_ref, be2_ref,
                          o_ref, *, n_heads, matmul_dtype):
    Bb, L, D = x_ref.shape
    H = n_heads
    E = D // H
    N = Bb * L
    eps = 1e-5
    mdt = matmul_dtype

    def mm(a, b):
        # MXU matmul; operands optionally cast (bf16 on v6e/v7x), accumulate in f32.
        return jnp.dot(a.astype(mdt), b.astype(mdt),
                       preferred_element_type=jnp.float32)

    def bmm(eq, a, b):
        return jnp.einsum(eq, a.astype(mdt), b.astype(mdt),
                          preferred_element_type=jnp.float32)

    def layer_norm(t, g, be):
        # One-pass LN: 2 lane reductions instead of 4 (var = E[t^2] - mu^2).
        mu = jnp.mean(t, axis=-1, keepdims=True)
        ms = jnp.mean(t * t, axis=-1, keepdims=True)
        var = ms - mu * mu
        return (t - mu) * jax.lax.rsqrt(var + eps) * g + be

    # Flatten (Bb, L, D) -> (Bb*L, D): every per-token op works on the big row slab.
    x2d = x_ref[...].reshape(N, D).astype(jnp.float32)

    # ---- self-attention: per-head weight slabs, per-head accumulation into Wo ----
    # 1/sqrt(E) is already folded into wq_ref / bq_ref by prepare_params.
    acc = None
    for h in range(H):                                   # static unroll, small H
        q_h = (mm(x2d, wq_ref[h]) + bq_ref[h]).reshape(Bb, L, E)
        k_h = (mm(x2d, wk_ref[h]) + bk_ref[h]).reshape(Bb, L, E)
        v_h = (mm(x2d, wv_ref[h]) + bv_ref[h]).reshape(Bb, L, E)

        s = bmm('ble,bse->bls', q_h, k_h)                # (Bb, L, L), batched over Bb
        s = s - jnp.max(s, axis=-1, keepdims=True)
        p = jnp.exp(s)
        inv = pl.reciprocal(jnp.sum(p, axis=-1, keepdims=True), approx=True)  # EUP
        o_h = bmm('bls,bse->ble', p, v_h) * inv          # normalize the (L,E) result

        # fold the head concat into the output projection: accumulate on the MXU
        contrib = mm(o_h.reshape(N, E), wo_ref[h])       # (N, D)
        acc = contrib if acc is None else acc + contrib
    attn = acc + bo_ref[...]

    # ---- residual + LayerNorm1 ----
    y = layer_norm(x2d + attn, g1_ref[...], be1_ref[...])

    # ---- FFN: Conv1d(k=1) == per-token linear; ReLU; lane-dense Dff path ----
    h1 = jnp.maximum(mm(y, w1_ref[...]) + b1_ref[...], 0.0)   # (N, Dff)
    h2 = mm(h1, w2_ref[...]) + b2_ref[...]                    # (N, D)

    # ---- residual + LayerNorm2 ----
    out = layer_norm(y + h2, g2_ref[...], be2_ref[...])

    o_ref[...] = out.reshape(Bb, L, D).astype(o_ref.dtype)


def prepare_params(wq, bq, wk, bk, wv, bv, wo, bo, w1, b1, w2, b2,
                   g1, be1, g2, be2, *, n_heads):
    """One-time parameter packing (outside the per-call path):
       - per-head Q/K/V slabs (H, D, E) so the kernel never lane-slices q/k/v,
       - 1/sqrt(E) folded into the Q weights & bias,
       - Wo reshaped to (H, E, D) for per-head output-projection accumulation."""
    D = wq.shape[0]
    H = n_heads
    E = D // H
    scale = 1.0 / float(np.sqrt(E))
    wqh = jnp.transpose((wq * scale).reshape(D, H, E), (1, 0, 2))
    wkh = jnp.transpose(wk.reshape(D, H, E), (1, 0, 2))
    wvh = jnp.transpose(wv.reshape(D, H, E), (1, 0, 2))
    bqh = (bq * scale).reshape(H, 1, E)
    bkh = bk.reshape(H, 1, E)
    bvh = bv.reshape(H, 1, E)
    woh = wo.reshape(H, E, D)
    return (wqh, bqh, wkh, bkh, wvh, bvh, woh, bo,
            w1, b1, w2, b2, g1, be1, g2, be2)


def encoder_layer_forward(x, params, *, n_heads, matmul_dtype=jnp.float32,
                          block_b=None):
    """x: [B, L, D]; params from prepare_params.  Returns [B, L, D]."""
    B, L, D = x.shape
    (wqh, bqh, wkh, bkh, wvh, bvh, woh, bo,
     w1, b1, w2, b2, g1, be1, g2, be2) = params
    H = n_heads
    E = D // H
    Dff = w1.shape[1]

    if block_b is None:
        # Largest divisor of B whose block keeps <= ~128 token rows: amortizes the
        # per-step pipeline overhead while bounding the live (Bb,H,L,L) score tiles.
        # (On v7x, prefer block_b = B//2 when B*L is large so both TensorCores work.)
        cap = max(L, 128)
        block_b = 1
        for d in range(1, B + 1):
            if B % d == 0 and d * L <= cap:
                block_b = d
    grid = (B // block_b,)

    def const_spec(shape):
        nd = len(shape)
        return pl.BlockSpec(shape, lambda i, _nd=nd: (0,) * _nd)

    kernel = functools.partial(_encoder_layer_kernel, n_heads=H,
                               matmul_dtype=matmul_dtype)
    return pl.pallas_call(
        kernel,
        out_shape=jax.ShapeDtypeStruct((B, L, D), x.dtype),
        grid=grid,
        in_specs=[
            pl.BlockSpec((block_b, L, D), lambda i: (i, 0, 0)),   # x
            const_spec((H, D, E)), const_spec((H, 1, E)),         # Q slabs (pre-scaled)
            const_spec((H, D, E)), const_spec((H, 1, E)),         # K slabs
            const_spec((H, D, E)), const_spec((H, 1, E)),         # V slabs
            const_spec((H, E, D)), const_spec((1, D)),            # Wo (per-head), bo
            const_spec((D, Dff)), const_spec((1, Dff)),           # conv1 (k=1)
            const_spec((Dff, D)), const_spec((1, D)),             # conv2 (k=1)
            const_spec((1, D)), const_spec((1, D)),               # LayerNorm1 gamma/beta
            const_spec((1, D)), const_spec((1, D)),               # LayerNorm2 gamma/beta
        ],
        out_specs=pl.BlockSpec((block_b, L, D), lambda i: (i, 0, 0)),
        compiler_params=pltpu.CompilerParams(dimension_semantics=("parallel",)),
    )(x, wqh, bqh, wkh, bkh, wvh, bvh, woh, bo,
      w1, b1, w2, b2, g1, be1, g2, be2)


def ref_forward(x, wq, bq, wk, bk, wv, bv, wo, bo, w1, b1, w2, b2,
                g1, be1, g2, be2, *, n_heads):
    """Plain-JAX reference mirroring the PyTorch EncoderLayer forward (eval mode)."""
    B, L, D = x.shape
    H = n_heads
    E = D // H
    eps = 1e-5
    scale = 1.0 / float(np.sqrt(E))

    q = (x @ wq + bq).reshape(B, L, H, E)
    k = (x @ wk + bk).reshape(B, L, H, E)
    v = (x @ wv + bv).reshape(B, L, H, E)
    s = jnp.einsum('blhe,bshe->bhls', q, k) * scale
    s = s - jnp.max(s, axis=-1, keepdims=True)
    p = jnp.exp(s)
    a = p / jnp.sum(p, axis=-1, keepdims=True)
    o = jnp.einsum('bhls,bshe->blhe', a, v).reshape(B, L, D)
    attn = o @ wo + bo

    def ln(t, g, be):
        mu = jnp.mean(t, axis=-1, keepdims=True)
        var = jnp.mean((t - mu) ** 2, axis=-1, keepdims=True)
        return (t - mu) * jax.lax.rsqrt(var + eps) * g + be

    y = ln(x + attn, g1, be1)
    h1 = jnp.maximum(y @ w1 + b1, 0.0)
    h2 = h1 @ w2 + b2
    return ln(y + h2, g2, be2)


if __name__ == "__main__":
    B, L, D, H = 2, 16, 32, 4          # batch, seq, d_model, n_heads
    Dff = 4 * D                        # d_ffn default = 4 * d_model = 128 (lane-dense)

    key = jax.random.PRNGKey(0)
    ks = jax.random.split(key, 13)

    def lin_init(k, fan_in, shape):
        bound = float(1.0 / np.sqrt(fan_in))
        return jax.random.uniform(k, shape, jnp.float32, -bound, bound)

    x = jax.random.normal(ks[0], (B, L, D), jnp.float32)

    # Deterministic synthetic parameters (Linear/Conv1d-default-style uniform init).
    wq = lin_init(ks[1], D, (D, D));    bq = lin_init(ks[2], D, (1, D))
    wk = lin_init(ks[3], D, (D, D));    bk = lin_init(ks[4], D, (1, D))
    wv = lin_init(ks[5], D, (D, D));    bv = lin_init(ks[6], D, (1, D))
    wo = lin_init(ks[7], D, (D, D));    bo = lin_init(ks[8], D, (1, D))
    w1 = lin_init(ks[9], D, (D, Dff));  b1 = lin_init(ks[10], D, (1, Dff))
    w2 = lin_init(ks[11], Dff, (Dff, D)); b2 = lin_init(ks[12], Dff, (1, D))
    g1 = jnp.ones((1, D), jnp.float32); be1 = jnp.zeros((1, D), jnp.float32)
    g2 = jnp.ones((1, D), jnp.float32); be2 = jnp.zeros((1, D), jnp.float32)

    params = prepare_params(wq, bq, wk, bk, wv, bv, wo, bo, w1, b1, w2, b2,
                            g1, be1, g2, be2, n_heads=H)

    # matmul_dtype=jnp.bfloat16 on v6e/v7x production shapes (loosen tolerances then).
    out = encoder_layer_forward(x, params, n_heads=H, matmul_dtype=jnp.float32)
    out = jax.block_until_ready(out)

    ref = ref_forward(x, wq, bq, wk, bk, wv, bv, wo, bo, w1, b1, w2, b2,
                      g1, be1, g2, be2, n_heads=H)
    # Tolerance accounts for the approximate (EUP) softmax reciprocal.
    np.testing.assert_allclose(np.asarray(out), np.asarray(ref), rtol=1e-2, atol=1e-2)
    print("KERNEL_OK")
</pallas_src>

<mosaic_0001>
module attributes {stable_mosaic.version = 11 : i64} {
  func.func @_encoder_layer_kernel(%arg0: i32, %arg1: memref<2x16x32xf32, #tpu.memory_space<vmem>>, %arg2: memref<4x32x8xf32, #tpu.memory_space<vmem>>, %arg3: memref<4x1x8xf32, #tpu.memory_space<vmem>>, %arg4: memref<4x32x8xf32, #tpu.memory_space<vmem>>, %arg5: memref<4x1x8xf32, #tpu.memory_space<vmem>>, %arg6: memref<4x32x8xf32, #tpu.memory_space<vmem>>, %arg7: memref<4x1x8xf32, #tpu.memory_space<vmem>>, %arg8: memref<4x8x32xf32, #tpu.memory_space<vmem>>, %arg9: memref<1x32xf32, #tpu.memory_space<vmem>>, %arg10: memref<32x128xf32, #tpu.memory_space<vmem>>, %arg11: memref<1x128xf32, #tpu.memory_space<vmem>>, %arg12: memref<128x32xf32, #tpu.memory_space<vmem>>, %arg13: memref<1x32xf32, #tpu.memory_space<vmem>>, %arg14: memref<1x32xf32, #tpu.memory_space<vmem>>, %arg15: memref<1x32xf32, #tpu.memory_space<vmem>>, %arg16: memref<1x32xf32, #tpu.memory_space<vmem>>, %arg17: memref<1x32xf32, #tpu.memory_space<vmem>>, %arg18: memref<2x16x32xf32, #tpu.memory_space<vmem>>) attributes {dimension_semantics = [#tpu.dimension_semantics<parallel>], iteration_bounds = array<i64: 1>, scalar_prefetch = 0 : i64, scratch_operands = 0 : i64, tpu.core_type = #tpu.core_type<tc>, window_params = [{transform_indices = @transform_0, window_bounds = array<i64: 2, 16, 32>}, {pipeline_mode = #tpu.pipeline_mode<synchronous>, transform_indices = @transform_1, window_bounds = array<i64: 4, 32, 8>}, {pipeline_mode = #tpu.pipeline_mode<synchronous>, transform_indices = @transform_2, window_bounds = array<i64: 4, 1, 8>}, {pipeline_mode = #tpu.pipeline_mode<synchronous>, transform_indices = @transform_3, window_bounds = array<i64: 4, 32, 8>}, {pipeline_mode = #tpu.pipeline_mode<synchronous>, transform_indices = @transform_4, window_bounds = array<i64: 4, 1, 8>}, {pipeline_mode = #tpu.pipeline_mode<synchronous>, transform_indices = @transform_5, window_bounds = array<i64: 4, 32, 8>}, {pipeline_mode = #tpu.pipeline_mode<synchronous>, transform_indices = @transform_6, window_bounds = array<i64: 4, 1, 8>}, {pipeline_mode = #tpu.pipeline_mode<synchronous>, transform_indices = @transform_7, window_bounds = array<i64: 4, 8, 32>}, {pipeline_mode = #tpu.pipeline_mode<synchronous>, transform_indices = @transform_8, window_bounds = array<i64: 1, 32>}, {pipeline_mode = #tpu.pipeline_mode<synchronous>, transform_indices = @transform_9, window_bounds = array<i64: 32, 128>}, {pipeline_mode = #tpu.pipeline_mode<synchronous>, transform_indices = @transform_10, window_bounds = array<i64: 1, 128>}, {pipeline_mode = #tpu.pipeline_mode<synchronous>, transform_indices = @transform_11, window_bounds = array<i64: 128, 32>}, {pipeline_mode = #tpu.pipeline_mode<synchronous>, transform_indices = @transform_12, window_bounds = array<i64: 1, 32>}, {pipeline_mode = #tpu.pipeline_mode<synchronous>, transform_indices = @transform_13, window_bounds = array<i64: 1, 32>}, {pipeline_mode = #tpu.pipeline_mode<synchronous>, transform_indices = @transform_14, window_bounds = array<i64: 1, 32>}, {pipeline_mode = #tpu.pipeline_mode<synchronous>, transform_indices = @transform_15, window_bounds = array<i64: 1, 32>}, {pipeline_mode = #tpu.pipeline_mode<synchronous>, transform_indices = @transform_16, window_bounds = array<i64: 1, 32>}, {transform_indices = @transform_17, window_bounds = array<i64: 2, 16, 32>}]} {
    %c0 = arith.constant 0 : index
    %c0_0 = arith.constant 0 : index
    %c0_1 = arith.constant 0 : index
    %0 = vector.load %arg1[%c0, %c0_0, %c0_1] : memref<2x16x32xf32, #tpu.memory_space<vmem>>, vector<2x16x32xf32>
    %1 = vector.shape_cast %0 : vector<2x16x32xf32> to vector<32x32xf32>
    %c0_2 = arith.constant 0 : index
    %c0_3 = arith.constant 0 : index
    %c0_4 = arith.constant 0 : index
    %2 = vector.load %arg2[%c0_2, %c0_3, %c0_4] : memref<4x32x8xf32, #tpu.memory_space<vmem>>, vector<1x32x8xf32>
    %3 = vector.shape_cast %2 : vector<1x32x8xf32> to vector<32x8xf32>
    %cst = arith.constant dense<0.000000e+00> : vector<32x8xf32>
    %4 = tpu.matmul %1, %3, %cst {dimension_numbers = #tpu.dot_dimension_numbers<[1], [0], [0], [1], [0, 0, 1, 1], [], []>} : vector<32x32xf32>, vector<32x8xf32>, vector<32x8xf32> -> vector<32x8xf32>
    %c0_5 = arith.constant 0 : index
    %c0_6 = arith.constant 0 : index
    %c0_7 = arith.constant 0 : index
    %5 = vector.load %arg3[%c0_5, %c0_6, %c0_7] : memref<4x1x8xf32, #tpu.memory_space<vmem>>, vector<1x1x8xf32>
    %6 = vector.shape_cast %5 : vector<1x1x8xf32> to vector<1x8xf32>
    %7 = vector.broadcast %6 : vector<1x8xf32> to vector<32x8xf32>
    %8 = arith.addf %4, %7 : vector<32x8xf32>
    %9 = vector.shape_cast %8 : vector<32x8xf32> to vector<2x16x8xf32>
    %c0_8 = arith.constant 0 : index
    %c0_9 = arith.constant 0 : index
    %c0_10 = arith.constant 0 : index
    %10 = vector.load %arg4[%c0_8, %c0_9, %c0_10] : memref<4x32x8xf32, #tpu.memory_space<vmem>>, vector<1x32x8xf32>
    %11 = vector.shape_cast %10 : vector<1x32x8xf32> to vector<32x8xf32>
    %cst_11 = arith.constant dense<0.000000e+00> : vector<32x8xf32>
    %12 = tpu.matmul %1, %11, %cst_11 {dimension_numbers = #tpu.dot_dimension_numbers<[1], [0], [0], [1], [0, 0, 1, 1], [], []>} : vector<32x32xf32>, vector<32x8xf32>, vector<32x8xf32> -> vector<32x8xf32>
    %c0_12 = arith.constant 0 : index
    %c0_13 = arith.constant 0 : index
    %c0_14 = arith.constant 0 : index
    %13 = vector.load %arg5[%c0_12, %c0_13, %c0_14] : memref<4x1x8xf32, #tpu.memory_space<vmem>>, vector<1x1x8xf32>
    %14 = vector.shape_cast %13 : vector<1x1x8xf32> to vector<1x8xf32>
    %15 = vector.broadcast %14 : vector<1x8xf32> to vector<32x8xf32>
    %16 = arith.addf %12, %15 : vector<32x8xf32>
    %17 = vector.shape_cast %16 : vector<32x8xf32> to vector<2x16x8xf32>
    %c0_15 = arith.constant 0 : index
    %c0_16 = arith.constant 0 : index
    %c0_17 = arith.constant 0 : index
    %18 = vector.load %arg6[%c0_15, %c0_16, %c0_17] : memref<4x32x8xf32, #tpu.memory_space<vmem>>, vector<1x32x8xf32>
    %19 = vector.shape_cast %18 : vector<1x32x8xf32> to vector<32x8xf32>
    %cst_18 = arith.constant dense<0.000000e+00> : vector<32x8xf32>
    %20 = tpu.matmul %1, %19, %cst_18 {dimension_numbers = #tpu.dot_dimension_numbers<[1], [0], [0], [1], [0, 0, 1, 1], [], []>} : vector<32x32xf32>, vector<32x8xf32>, vector<32x8xf32> -> vector<32x8xf32>
    %c0_19 = arith.constant 0 : index
    %c0_20 = arith.constant 0 : index
    %c0_21 = arith.constant 0 : index
    %21 = vector.load %arg7[%c0_19, %c0_20, %c0_21] : memref<4x1x8xf32, #tpu.memory_space<vmem>>, vector<1x1x8xf32>
    %22 = vector.shape_cast %21 : vector<1x1x8xf32> to vector<1x8xf32>
    %23 = vector.broadcast %22 : vector<1x8xf32> to vector<32x8xf32>
    %24 = arith.addf %20, %23 : vector<32x8xf32>
    %25 = vector.shape_cast %24 : vector<32x8xf32> to vector<2x16x8xf32>
    "tpu.trace_start"() <{level = 10 : i32, message = "ble,bse->bls"}> : () -> ()
    %cst_22 = arith.constant dense<0.000000e+00> : vector<2x16x16xf32>
    %26 = tpu.matmul %9, %17, %cst_22 {dimension_numbers = #tpu.dot_dimension_numbers<[2], [2], [1], [1], [0, 0, 0, 1, 1, 1], [0], [0]>} : vector<2x16x8xf32>, vector<2x16x8xf32>, vector<2x16x16xf32> -> vector<2x16x16xf32>
    "tpu.trace_stop"() : () -> ()
    %cst_23 = arith.constant dense<0xFF800000> : vector<2x16xf32>
    %27 = vector.multi_reduction <maximumf>, %26, %cst_23 [2] : vector<2x16x16xf32> to vector<2x16xf32>
    %28 = vector.shape_cast %27 : vector<2x16xf32> to vector<2x16x1xf32>
    %29 = vector.broadcast %28 : vector<2x16x1xf32> to vector<2x16x16xf32>
    %30 = arith.subf %26, %29 : vector<2x16x16xf32>
    %31 = math.exp %30 : vector<2x16x16xf32>
    %cst_24 = arith.constant dense<0.000000e+00> : vector<2x16xf32>
    %32 = vector.multi_reduction <add>, %31, %cst_24 [2] : vector<2x16x16xf32> to vector<2x16xf32>
    %33 = vector.shape_cast %32 : vector<2x16xf32> to vector<2x16x1xf32>
    %34 = tpu.reciprocal %33 {approx = true} : vector<2x16x1xf32> -> vector<2x16x1xf32>
    "tpu.trace_start"() <{level = 10 : i32, message = "bls,bse->ble"}> : () -> ()
    %cst_25 = arith.constant dense<0.000000e+00> : vector<2x16x8xf32>
    %35 = tpu.matmul %31, %25, %cst_25 {dimension_numbers = #tpu.dot_dimension_numbers<[2], [1], [1], [2], [0, 0, 0, 1, 1, 2], [0], [0]>} : vector<2x16x16xf32>, vector<2x16x8xf32>, vector<2x16x8xf32> -> vector<2x16x8xf32>
    "tpu.trace_stop"() : () -> ()
    %36 = vector.broadcast %34 : vector<2x16x1xf32> to vector<2x16x8xf32>
    %37 = arith.mulf %35, %36 : vector<2x16x8xf32>
    %38 = vector.shape_cast %37 : vector<2x16x8xf32> to vector<32x8xf32>
    %c0_26 = arith.constant 0 : index
    %c0_27 = arith.constant 0 : index
    %c0_28 = arith.constant 0 : index
    %39 = vector.load %arg8[%c0_26, %c0_27, %c0_28] : memref<4x8x32xf32, #tpu.memory_space<vmem>>, vector<1x8x32xf32>
    %40 = vector.shape_cast %39 : vector<1x8x32xf32> to vector<8x32xf32>
    %cst_29 = arith.constant dense<0.000000e+00> : vector<32x32xf32>
    %41 = tpu.matmul %38, %40, %cst_29 {dimension_numbers = #tpu.dot_dimension_numbers<[1], [0], [0], [1], [0, 0, 1, 1], [], []>} : vector<32x8xf32>, vector<8x32xf32>, vector<32x32xf32> -> vector<32x32xf32>
    %c1 = arith.constant 1 : index
    %c0_30 = arith.constant 0 : index
    %c0_31 = arith.constant 0 : index
    %42 = vector.load %arg2[%c1, %c0_30, %c0_31] : memref<4x32x8xf32, #tpu.memory_space<vmem>>, vector<1x32x8xf32>
    %43 = vector.shape_cast %42 : vector<1x32x8xf32> to vector<32x8xf32>
    %cst_32 = arith.constant dense<0.000000e+00> : vector<32x8xf32>
    %44 = tpu.matmul %1, %43, %cst_32 {dimension_numbers = #tpu.dot_dimension_numbers<[1], [0], [0], [1], [0, 0, 1, 1], [], []>} : vector<32x32xf32>, vector<32x8xf32>, vector<32x8xf32> -> vector<32x8xf32>
    %c1_33 = arith.constant 1 : index
    %c0_34 = arith.constant 0 : index
    %c0_35 = arith.constant 0 : index
    %45 = vector.load %arg3[%c1_33, %c0_34, %c0_35] : memref<4x1x8xf32, #tpu.memory_space<vmem>>, vector<1x1x8xf32>
    %46 = vector.shape_cast %45 : vector<1x1x8xf32> to vector<1x8xf32>
    %47 = vector.broadcast %46 : vector<1x8xf32> to vector<32x8xf32>
    %48 = arith.addf %44, %47 : vector<32x8xf32>
    %49 = vector.shape_cast %48 : vector<32x8xf32> to vector<2x16x8xf32>
    %c1_36 = arith.constant 1 : index
    %c0_37 = arith.constant 0 : index
    %c0_38 = arith.constant 0 : index
    %50 = vector.load %arg4[%c1_36, %c0_37, %c0_38] : memref<4x32x8xf32, #tpu.memory_space<vmem>>, vector<1x32x8xf32>
    %51 = vector.shape_cast %50 : vector<1x32x8xf32> to vector<32x8xf32>
    %cst_39 = arith.constant dense<0.000000e+00> : vector<32x8xf32>
    %52 = tpu.matmul %1, %51, %cst_39 {dimension_numbers = #tpu.dot_dimension_numbers<[1], [0], [0], [1], [0, 0, 1, 1], [], []>} : vector<32x32xf32>, vector<32x8xf32>, vector<32x8xf32> -> vector<32x8xf32>
    %c1_40 = arith.constant 1 : index
    %c0_41 = arith.constant 0 : index
    %c0_42 = arith.constant 0 : index
    %53 = vector.load %arg5[%c1_40, %c0_41, %c0_42] : memref<4x1x8xf32, #tpu.memory_space<vmem>>, vector<1x1x8xf32>
    %54 = vector.shape_cast %53 : vector<1x1x8xf32> to vector<1x8xf32>
    %55 = vector.broadcast %54 : vector<1x8xf32> to vector<32x8xf32>
    %56 = arith.addf %52, %55 : vector<32x8xf32>
    %57 = vector.shape_cast %56 : vector<32x8xf32> to vector<2x16x8xf32>
    %c1_43 = arith.constant 1 : index
    %c0_44 = arith.constant 0 : index
    %c0_45 = arith.constant 0 : index
    %58 = vector.load %arg6[%c1_43, %c0_44, %c0_45] : memref<4x32x8xf32, #tpu.memory_space<vmem>>, vector<1x32x8xf32>
    %59 = vector.shape_cast %58 : vector<1x32x8xf32> to vector<32x8xf32>
    %cst_46 = arith.constant dense<0.000000e+00> : vector<32x8xf32>
    %60 = tpu.matmul %1, %59, %cst_46 {dimension_numbers = #tpu.dot_dimension_numbers<[1], [0], [0], [1], [0, 0, 1, 1], [], []>} : vector<32x32xf32>, vector<32x8xf32>, vector<32x8xf32> -> vector<32x8xf32>
    %c1_47 = arith.constant 1 : index
    %c0_48 = arith.constant 0 : index
    %c0_49 = arith.constant 0 : index
    %61 = vector.load %arg7[%c1_47, %c0_48, %c0_49] : memref<4x1x8xf32, #tpu.memory_space<vmem>>, vector<1x1x8xf32>
    %62 = vector.shape_cast %61 : vector<1x1x8xf32> to vector<1x8xf32>
    %63 = vector.broadcast %62 : vector<1x8xf32> to vector<32x8xf32>
    %64 = arith.addf %60, %63 : vector<32x8xf32>
    %65 = vector.shape_cast %64 : vector<32x8xf32> to vector<2x16x8xf32>
    "tpu.trace_start"() <{level = 10 : i32, message = "ble,bse->bls"}> : () -> ()
    %cst_50 = arith.constant dense<0.000000e+00> : vector<2x16x16xf32>
    %66 = tpu.matmul %49, %57, %cst_50 {dimension_numbers = #tpu.dot_dimension_numbers<[2], [2], [1], [1], [0, 0, 0, 1, 1, 1], [0], [0]>} : vector<2x16x8xf32>, vector<2x16x8xf32>, vector<2x16x16xf32> -> vector<2x16x16xf32>
    "tpu.trace_stop"() : () -> ()
    %cst_51 = arith.constant dense<0xFF800000> : vector<2x16xf32>
    %67 = vector.multi_reduction <maximumf>, %66, %cst_51 [2] : vector<2x16x16xf32> to vector<2x16xf32>
    %68 = vector.shape_cast %67 : vector<2x16xf32> to vector<2x16x1xf32>
    %69 = vector.broadcast %68 : vector<2x16x1xf32> to vector<2x16x16xf32>
    %70 = arith.subf %66, %69 : vector<2x16x16xf32>
    %71 = math.exp %70 : vector<2x16x16xf32>
    %cst_52 = arith.constant dense<0.000000e+00> : vector<2x16xf32>
    %72 = vector.multi_reduction <add>, %71, %cst_52 [2] : vector<2x16x16xf32> to vector<2x16xf32>
    %73 = vector.shape_cast %72 : vector<2x16xf32> to vector<2x16x1xf32>
    %74 = tpu.reciprocal %73 {approx = true} : vector<2x16x1xf32> -> vector<2x16x1xf32>
    "tpu.trace_start"() <{level = 10 : i32, message = "bls,bse->ble"}> : () -> ()
    %cst_53 = arith.constant dense<0.000000e+00> : vector<2x16x8xf32>
    %75 = tpu.matmul %71, %65, %cst_53 {dimension_numbers = #tpu.dot_dimension_numbers<[2], [1], [1], [2], [0, 0, 0, 1, 1, 2], [0], [0]>} : vector<2x16x16xf32>, vector<2x16x8xf32>, vector<2x16x8xf32> -> vector<2x16x8xf32>
    "tpu.trace_stop"() : () -> ()
    %76 = vector.broadcast %74 : vector<2x16x1xf32> to vector<2x16x8xf32>
    %77 = arith.mulf %75, %76 : vector<2x16x8xf32>
    %78 = vector.shape_cast %77 : vector<2x16x8xf32> to vector<32x8xf32>
    %c1_54 = arith.constant 1 : index
    %c0_55 = arith.constant 0 : index
    %c0_56 = arith.constant 0 : index
    %79 = vector.load %arg8[%c1_54, %c0_55, %c0_56] : memref<4x8x32xf32, #tpu.memory_space<vmem>>, vector<1x8x32xf32>
    %80 = vector.shape_cast %79 : vector<1x8x32xf32> to vector<8x32xf32>
    %cst_57 = arith.constant dense<0.000000e+00> : vector<32x32xf32>
    %81 = tpu.matmul %78, %80, %cst_57 {dimension_numbers = #tpu.dot_dimension_numbers<[1], [0], [0], [1], [0, 0, 1, 1], [], []>} : vector<32x8xf32>, vector<8x32xf32>, vector<32x32xf32> -> vector<32x32xf32>
    %82 = arith.addf %41, %81 : vector<32x32xf32>
    %c2 = arith.constant 2 : index
    %c0_58 = arith.constant 0 : index
    %c0_59 = arith.constant 0 : index
    %83 = vector.load %arg2[%c2, %c0_58, %c0_59] : memref<4x32x8xf32, #tpu.memory_space<vmem>>, vector<1x32x8xf32>
    %84 = vector.shape_cast %83 : vector<1x32x8xf32> to vector<32x8xf32>
    %cst_60 = arith.constant dense<0.000000e+00> : vector<32x8xf32>
    %85 = tpu.matmul %1, %84, %cst_60 {dimension_numbers = #tpu.dot_dimension_numbers<[1], [0], [0], [1], [0, 0, 1, 1], [], []>} : vector<32x32xf32>, vector<32x8xf32>, vector<32x8xf32> -> vector<32x8xf32>
    %c2_61 = arith.constant 2 : index
    %c0_62 = arith.constant 0 : index
    %c0_63 = arith.constant 0 : index
    %86 = vector.load %arg3[%c2_61, %c0_62, %c0_63] : memref<4x1x8xf32, #tpu.memory_space<vmem>>, vector<1x1x8xf32>
    %87 = vector.shape_cast %86 : vector<1x1x8xf32> to vector<1x8xf32>
    %88 = vector.broadcast %87 : vector<1x8xf32> to vector<32x8xf32>
    %89 = arith.addf %85, %88 : vector<32x8xf32>
    %90 = vector.shape_cast %89 : vector<32x8xf32> to vector<2x16x8xf32>
    %c2_64 = arith.constant 2 : index
    %c0_65 = arith.constant 0 : index
    %c0_66 = arith.constant 0 : index
    %91 = vector.load %arg4[%c2_64, %c0_65, %c0_66] : memref<4x32x8xf32, #tpu.memory_space<vmem>>, vector<1x32x8xf32>
    %92 = vector.shape_cast %91 : vector<1x32x8xf32> to vector<32x8xf32>
    %cst_67 = arith.constant dense<0.000000e+00> : vector<32x8xf32>
    %93 = tpu.matmul %1, %92, %cst_67 {dimension_numbers = #tpu.dot_dimension_numbers<[1], [0], [0], [1], [0, 0, 1, 1], [], []>} : vector<32x32xf32>, vector<32x8xf32>, vector<32x8xf32> -> vector<32x8xf32>
    %c2_68 = arith.constant 2 : index
    %c0_69 = arith.constant 0 : index
    %c0_70 = arith.constant 0 : index
    %94 = vector.load %arg5[%c2_68, %c0_69, %c0_70] : memref<4x1x8xf32, #tpu.memory_space<vmem>>, vector<1x1x8xf32>
    %95 = vector.shape_cast %94 : vector<1x1x8xf32> to vector<1x8xf32>
    %96 = vector.broadcast %95 : vector<1x8xf32> to vector<32x8xf32>
    %97 = arith.addf %93, %96 : vector<32x8xf32>
    %98 = vector.shape_cast %97 : vector<32x8xf32> to vector<2x16x8xf32>
    %c2_71 = arith.constant 2 : index
    %c0_72 = arith.constant 0 : index
    %c0_73 = arith.constant 0 : index
    %99 = vector.load %arg6[%c2_71, %c0_72, %c0_73] : memref<4x32x8xf32, #tpu.memory_space<vmem>>, vector<1x32x8xf32>
    %100 = vector.shape_cast %99 : vector<1x32x8xf32> to vector<32x8xf32>
    %cst_74 = arith.constant dense<0.000000e+00> : vector<32x8xf32>
    %101 = tpu.matmul %1, %100, %cst_74 {dimension_numbers = #tpu.dot_dimension_numbers<[1], [0], [0], [1], [0, 0, 1, 1], [], []>} : vector<32x32xf32>, vector<32x8xf32>, vector<32x8xf32> -> vector<32x8xf32>
    %c2_75 = arith.constant 2 : index
    %c0_76 = arith.constant 0 : index
    %c0_77 = arith.constant 0 : index
    %102 = vector.load %arg7[%c2_75, %c0_76, %c0_77] : memref<4x1x8xf32, #tpu.memory_space<vmem>>, vector<1x1x8xf32>
    %103 = vector.shape_cast %102 : vector<1x1x8xf32> to vector<1x8xf32>
    %104 = vector.broadcast %103 : vector<1x8xf32> to vector<32x8xf32>
    %105 = arith.addf %101, %104 : vector<32x8xf32>
    %106 = vector.shape_cast %105 : vector<32x8xf32> to vector<2x16x8xf32>
    "tpu.trace_start"() <{level = 10 : i32, message = "ble,bse->bls"}> : () -> ()
    %cst_78 = arith.constant dense<0.000000e+00> : vector<2x16x16xf32>
    %107 = tpu.matmul %90, %98, %cst_78 {dimension_numbers = #tpu.dot_dimension_numbers<[2], [2], [1], [1], [0, 0, 0, 1, 1, 1], [0], [0]>} : vector<2x16x8xf32>, vector<2x16x8xf32>, vector<2x16x16xf32> -> vector<2x16x16xf32>
    "tpu.trace_stop"() : () -> ()
    %cst_79 = arith.constant dense<0xFF800000> : vector<2x16xf32>
    %108 = vector.multi_reduction <maximumf>, %107, %cst_79 [2] : vector<2x16x16xf32> to vector<2x16xf32>
    %109 = vector.shape_cast %108 : vector<2x16xf32> to vector<2x16x1xf32>
    %110 = vector.broadcast %109 : vector<2x16x1xf32> to vector<2x16x16xf32>
    %111 = arith.subf %107, %110 : vector<2x16x16xf32>
    %112 = math.exp %111 : vector<2x16x16xf32>
    %cst_80 = arith.constant dense<0.000000e+00> : vector<2x16xf32>
    %113 = vector.multi_reduction <add>, %112, %cst_80 [2] : vector<2x16x16xf32> to vector<2x16xf32>
    %114 = vector.shape_cast %113 : vector<2x16xf32> to vector<2x16x1xf32>
    %115 = tpu.reciprocal %114 {approx = true} : vector<2x16x1xf32> -> vector<2x16x1xf32>
    "tpu.trace_start"() <{level = 10 : i32, message = "bls,bse->ble"}> : () -> ()
    %cst_81 = arith.constant dense<0.000000e+00> : vector<2x16x8xf32>
    %116 = tpu.matmul %112, %106, %cst_81 {dimension_numbers = #tpu.dot_dimension_numbers<[2], [1], [1], [2], [0, 0, 0, 1, 1, 2], [0], [0]>} : vector<2x16x16xf32>, vector<2x16x8xf32>, vector<2x16x8xf32> -> vector<2x16x8xf32>
    "tpu.trace_stop"() : () -> ()
    %117 = vector.broadcast %115 : vector<2x16x1xf32> to vector<2x16x8xf32>
    %118 = arith.mulf %116, %117 : vector<2x16x8xf32>
    %119 = vector.shape_cast %118 : vector<2x16x8xf32> to vector<32x8xf32>
    %c2_82 = arith.constant 2 : index
    %c0_83 = arith.constant 0 : index
    %c0_84 = arith.constant 0 : index
    %120 = vector.load %arg8[%c2_82, %c0_83, %c0_84] : memref<4x8x32xf32, #tpu.memory_space<vmem>>, vector<1x8x32xf32>
    %121 = vector.shape_cast %120 : vector<1x8x32xf32> to vector<8x32xf32>
    %cst_85 = arith.constant dense<0.000000e+00> : vector<32x32xf32>
    %122 = tpu.matmul %119, %121, %cst_85 {dimension_numbers = #tpu.dot_dimension_numbers<[1], [0], [0], [1], [0, 0, 1, 1], [], []>} : vector<32x8xf32>, vector<8x32xf32>, vector<32x32xf32> -> vector<32x32xf32>
    %123 = arith.addf %82, %122 : vector<32x32xf32>
    %c3 = arith.constant 3 : index
    %c0_86 = arith.constant 0 : index
    %c0_87 = arith.constant 0 : index
    %124 = vector.load %arg2[%c3, %c0_86, %c0_87] : memref<4x32x8xf32, #tpu.memory_space<vmem>>, vector<1x32x8xf32>
    %125 = vector.shape_cast %124 : vector<1x32x8xf32> to vector<32x8xf32>
    %cst_88 = arith.constant dense<0.000000e+00> : vector<32x8xf32>
    %126 = tpu.matmul %1, %125, %cst_88 {dimension_numbers = #tpu.dot_dimension_numbers<[1], [0], [0], [1], [0, 0, 1, 1], [], []>} : vector<32x32xf32>, vector<32x8xf32>, vector<32x8xf32> -> vector<32x8xf32>
    %c3_89 = arith.constant 3 : index
    %c0_90 = arith.constant 0 : index
    %c0_91 = arith.constant 0 : index
    %127 = vector.load %arg3[%c3_89, %c0_90, %c0_91] : memref<4x1x8xf32, #tpu.memory_space<vmem>>, vector<1x1x8xf32>
    %128 = vector.shape_cast %127 : vector<1x1x8xf32> to vector<1x8xf32>
    %129 = vector.broadcast %128 : vector<1x8xf32> to vector<32x8xf32>
    %130 = arith.addf %126, %129 : vector<32x8xf32>
    %131 = vector.shape_cast %130 : vector<32x8xf32> to vector<2x16x8xf32>
    %c3_92 = arith.constant 3 : index
    %c0_93 = arith.constant 0 : index
    %c0_94 = arith.constant 0 : index
    %132 = vector.load %arg4[%c3_92, %c0_93, %c0_94] : memref<4x32x8xf32, #tpu.memory_space<vmem>>, vector<1x32x8xf32>
    %133 = vector.shape_cast %132 : vector<1x32x8xf32> to vector<32x8xf32>
    %cst_95 = arith.constant dense<0.000000e+00> : vector<32x8xf32>
    %134 = tpu.matmul %1, %133, %cst_95 {dimension_numbers = #tpu.dot_dimension_numbers<[1], [0], [0], [1], [0, 0, 1, 1], [], []>} : vector<32x32xf32>, vector<32x8xf32>, vector<32x8xf32> -> vector<32x8xf32>
    %c3_96 = arith.constant 3 : index
    %c0_97 = arith.constant 0 : index
    %c0_98 = arith.constant 0 : index
    %135 = vector.load %arg5[%c3_96, %c0_97, %c0_98] : memref<4x1x8xf32, #tpu.memory_space<vmem>>, vector<1x1x8xf32>
    %136 = vector.shape_cast %135 : vector<1x1x8xf32> to vector<1x8xf32>
    %137 = vector.broadcast %136 : vector<1x8xf32> to vector<32x8xf32>
    %138 = arith.addf %134, %137 : vector<32x8xf32>
    %139 = vector.shape_cast %138 : vector<32x8xf32> to vector<2x16x8xf32>
    %c3_99 = arith.constant 3 : index
    %c0_100 = arith.constant 0 : index
    %c0_101 = arith.constant 0 : index
    %140 = vector.load %arg6[%c3_99, %c0_100, %c0_101] : memref<4x32x8xf32, #tpu.memory_space<vmem>>, vector<1x32x8xf32>
    %141 = vector.shape_cast %140 : vector<1x32x8xf32> to vector<32x8xf32>
    %cst_102 = arith.constant dense<0.000000e+00> : vector<32x8xf32>
    %142 = tpu.matmul %1, %141, %cst_102 {dimension_numbers = #tpu.dot_dimension_numbers<[1], [0], [0], [1], [0, 0, 1, 1], [], []>} : vector<32x32xf32>, vector<32x8xf32>, vector<32x8xf32> -> vector<32x8xf32>
    %c3_103 = arith.constant 3 : index
    %c0_104 = arith.constant 0 : index
    %c0_105 = arith.constant 0 : index
    %143 = vector.load %arg7[%c3_103, %c0_104, %c0_105] : memref<4x1x8xf32, #tpu.memory_space<vmem>>, vector<1x1x8xf32>
    %144 = vector.shape_cast %143 : vector<1x1x8xf32> to vector<1x8xf32>
    %145 = vector.broadcast %144 : vector<1x8xf32> to vector<32x8xf32>
    %146 = arith.addf %142, %145 : vector<32x8xf32>
    %147 = vector.shape_cast %146 : vector<32x8xf32> to vector<2x16x8xf32>
    "tpu.trace_start"() <{level = 10 : i32, message = "ble,bse->bls"}> : () -> ()
    %cst_106 = arith.constant dense<0.000000e+00> : vector<2x16x16xf32>
    %148 = tpu.matmul %131, %139, %cst_106 {dimension_numbers = #tpu.dot_dimension_numbers<[2], [2], [1], [1], [0, 0, 0, 1, 1, 1], [0], [0]>} : vector<2x16x8xf32>, vector<2x16x8xf32>, vector<2x16x16xf32> -> vector<2x16x16xf32>
    "tpu.trace_stop"() : () -> ()
    %cst_107 = arith.constant dense<0xFF800000> : vector<2x16xf32>
    %149 = vector.multi_reduction <maximumf>, %148, %cst_107 [2] : vector<2x16x16xf32> to vector<2x16xf32>
    %150 = vector.shape_cast %149 : vector<2x16xf32> to vector<2x16x1xf32>
    %151 = vector.broadcast %150 : vector<2x16x1xf32> to vector<2x16x16xf32>
    %152 = arith.subf %148, %151 : vector<2x16x16xf32>
    %153 = math.exp %152 : vector<2x16x16xf32>
    %cst_108 = arith.constant dense<0.000000e+00> : vector<2x16xf32>
    %154 = vector.multi_reduction <add>, %153, %cst_108 [2] : vector<2x16x16xf32> to vector<2x16xf32>
    %155 = vector.shape_cast %154 : vector<2x16xf32> to vector<2x16x1xf32>
    %156 = tpu.reciprocal %155 {approx = true} : vector<2x16x1xf32> -> vector<2x16x1xf32>
    "tpu.trace_start"() <{level = 10 : i32, message = "bls,bse->ble"}> : () -> ()
    %cst_109 = arith.constant dense<0.000000e+00> : vector<2x16x8xf32>
    %157 = tpu.matmul %153, %147, %cst_109 {dimension_numbers = #tpu.dot_dimension_numbers<[2], [1], [1], [2], [0, 0, 0, 1, 1, 2], [0], [0]>} : vector<2x16x16xf32>, vector<2x16x8xf32>, vector<2x16x8xf32> -> vector<2x16x8xf32>
    "tpu.trace_stop"() : () -> ()
    %158 = vector.broadcast %156 : vector<2x16x1xf32> to vector<2x16x8xf32>
    %159 = arith.mulf %157, %158 : vector<2x16x8xf32>
    %160 = vector.shape_cast %159 : vector<2x16x8xf32> to vector<32x8xf32>
    %c3_110 = arith.constant 3 : index
    %c0_111 = arith.constant 0 : index
    %c0_112 = arith.constant 0 : index
    %161 = vector.load %arg8[%c3_110, %c0_111, %c0_112] : memref<4x8x32xf32, #tpu.memory_space<vmem>>, vector<1x8x32xf32>
    %162 = vector.shape_cast %161 : vector<1x8x32xf32> to vector<8x32xf32>
    %cst_113 = arith.constant dense<0.000000e+00> : vector<32x32xf32>
    %163 = tpu.matmul %160, %162, %cst_113 {dimension_numbers = #tpu.dot_dimension_numbers<[1], [0], [0], [1], [0, 0, 1, 1], [], []>} : vector<32x8xf32>, vector<8x32xf32>, vector<32x32xf32> -> vector<32x32xf32>
    %164 = arith.addf %123, %163 : vector<32x32xf32>
    %c0_114 = arith.constant 0 : index
    %c0_115 = arith.constant 0 : index
    %165 = vector.load %arg9[%c0_114, %c0_115] : memref<1x32xf32, #tpu.memory_space<vmem>>, vector<1x32xf32>
    %166 = vector.broadcast %165 : vector<1x32xf32> to vector<32x32xf32>
    %167 = arith.addf %164, %166 : vector<32x32xf32>
    %168 = arith.addf %1, %167 : vector<32x32xf32>
    %c0_116 = arith.constant 0 : index
    %c0_117 = arith.constant 0 : index
    %169 = vector.load %arg14[%c0_116, %c0_117] : memref<1x32xf32, #tpu.memory_space<vmem>>, vector<1x32xf32>
    %c0_118 = arith.constant 0 : index
    %c0_119 = arith.constant 0 : index
    %170 = vector.load %arg15[%c0_118, %c0_119] : memref<1x32xf32, #tpu.memory_space<vmem>>, vector<1x32xf32>
    %cst_120 = arith.constant dense<0.000000e+00> : vector<32xf32>
    %171 = vector.multi_reduction <add>, %168, %cst_120 [1] : vector<32x32xf32> to vector<32xf32>
    %172 = vector.shape_cast %171 : vector<32xf32> to vector<32x1xf32>
    %cst_121 = arith.constant 3.200000e+01 : f32
    %173 = vector.broadcast %cst_121 : f32 to vector<32x1xf32>
    %174 = arith.divf %172, %173 : vector<32x1xf32>
    %175 = arith.mulf %168, %168 : vector<32x32xf32>
    %cst_122 = arith.constant dense<0.000000e+00> : vector<32xf32>
    %176 = vector.multi_reduction <add>, %175, %cst_122 [1] : vector<32x32xf32> to vector<32xf32>
    %177 = vector.shape_cast %176 : vector<32xf32> to vector<32x1xf32>
    %cst_123 = arith.constant 3.200000e+01 : f32
    %178 = vector.broadcast %cst_123 : f32 to vector<32x1xf32>
    %179 = arith.divf %177, %178 : vector<32x1xf32>
    %180 = arith.mulf %174, %174 : vector<32x1xf32>
    %181 = arith.subf %179, %180 : vector<32x1xf32>
    %182 = vector.broadcast %174 : vector<32x1xf32> to vector<32x32xf32>
    %183 = arith.subf %168, %182 : vector<32x32xf32>
    %cst_124 = arith.constant 9.99999974E-6 : f32
    %184 = vector.broadcast %cst_124 : f32 to vector<32x1xf32>
    %185 = arith.addf %181, %184 : vector<32x1xf32>
    %186 = math.rsqrt %185 : vector<32x1xf32>
    %187 = vector.broadcast %186 : vector<32x1xf32> to vector<32x32xf32>
    %188 = arith.mulf %183, %187 : vector<32x32xf32>
    %189 = vector.broadcast %169 : vector<1x32xf32> to vector<32x32xf32>
    %190 = arith.mulf %188, %189 : vector<32x32xf32>
    %191 = vector.broadcast %170 : vector<1x32xf32> to vector<32x32xf32>
    %192 = arith.addf %190, %191 : vector<32x32xf32>
    %c0_125 = arith.constant 0 : index
    %c0_126 = arith.constant 0 : index
    %193 = vector.load %arg10[%c0_125, %c0_126] : memref<32x128xf32, #tpu.memory_space<vmem>>, vector<32x128xf32>
    %cst_127 = arith.constant dense<0.000000e+00> : vector<32x128xf32>
    %194 = tpu.matmul %192, %193, %cst_127 {dimension_numbers = #tpu.dot_dimension_numbers<[1], [0], [0], [1], [0, 0, 1, 1], [], []>} : vector<32x32xf32>, vector<32x128xf32>, vector<32x128xf32> -> vector<32x128xf32>
    %c0_128 = arith.constant 0 : index
    %c0_129 = arith.constant 0 : index
    %195 = vector.load %arg11[%c0_128, %c0_129] : memref<1x128xf32, #tpu.memory_space<vmem>>, vector<1x128xf32>
    %196 = vector.broadcast %195 : vector<1x128xf32> to vector<32x128xf32>
    %197 = arith.addf %194, %196 : vector<32x128xf32>
    %cst_130 = arith.constant 0.000000e+00 : f32
    %198 = vector.broadcast %cst_130 : f32 to vector<32x128xf32>
    %199 = arith.maximumf %197, %198 : vector<32x128xf32>
    %c0_131 = arith.constant 0 : index
    %c0_132 = arith.constant 0 : index
    %200 = vector.load %arg12[%c0_131, %c0_132] : memref<128x32xf32, #tpu.memory_space<vmem>>, vector<128x32xf32>
    %cst_133 = arith.constant dense<0.000000e+00> : vector<32x32xf32>
    %201 = tpu.matmul %199, %200, %cst_133 {dimension_numbers = #tpu.dot_dimension_numbers<[1], [0], [0], [1], [0, 0, 1, 1], [], []>} : vector<32x128xf32>, vector<128x32xf32>, vector<32x32xf32> -> vector<32x32xf32>
    %c0_134 = arith.constant 0 : index
    %c0_135 = arith.constant 0 : index
    %202 = vector.load %arg13[%c0_134, %c0_135] : memref<1x32xf32, #tpu.memory_space<vmem>>, vector<1x32xf32>
    %203 = vector.broadcast %202 : vector<1x32xf32> to vector<32x32xf32>
    %204 = arith.addf %201, %203 : vector<32x32xf32>
    %205 = arith.addf %192, %204 : vector<32x32xf32>
    %c0_136 = arith.constant 0 : index
    %c0_137 = arith.constant 0 : index
    %206 = vector.load %arg16[%c0_136, %c0_137] : memref<1x32xf32, #tpu.memory_space<vmem>>, vector<1x32xf32>
    %c0_138 = arith.constant 0 : index
    %c0_139 = arith.constant 0 : index
    %207 = vector.load %arg17[%c0_138, %c0_139] : memref<1x32xf32, #tpu.memory_space<vmem>>, vector<1x32xf32>
    %cst_140 = arith.constant dense<0.000000e+00> : vector<32xf32>
    %208 = vector.multi_reduction <add>, %205, %cst_140 [1] : vector<32x32xf32> to vector<32xf32>
    %209 = vector.shape_cast %208 : vector<32xf32> to vector<32x1xf32>
    %cst_141 = arith.constant 3.200000e+01 : f32
    %210 = vector.broadcast %cst_141 : f32 to vector<32x1xf32>
    %211 = arith.divf %209, %210 : vector<32x1xf32>
    %212 = arith.mulf %205, %205 : vector<32x32xf32>
    %cst_142 = arith.constant dense<0.000000e+00> : vector<32xf32>
    %213 = vector.multi_reduction <add>, %212, %cst_142 [1] : vector<32x32xf32> to vector<32xf32>
    %214 = vector.shape_cast %213 : vector<32xf32> to vector<32x1xf32>
    %cst_143 = arith.constant 3.200000e+01 : f32
    %215 = vector.broadcast %cst_143 : f32 to vector<32x1xf32>
    %216 = arith.divf %214, %215 : vector<32x1xf32>
    %217 = arith.mulf %211, %211 : vector<32x1xf32>
    %218 = arith.subf %216, %217 : vector<32x1xf32>
    %219 = vector.broadcast %211 : vector<32x1xf32> to vector<32x32xf32>
    %220 = arith.subf %205, %219 : vector<32x32xf32>
    %cst_144 = arith.constant 9.99999974E-6 : f32
    %221 = vector.broadcast %cst_144 : f32 to vector<32x1xf32>
    %222 = arith.addf %218, %221 : vector<32x1xf32>
    %223 = math.rsqrt %222 : vector<32x1xf32>
    %224 = vector.broadcast %223 : vector<32x1xf32> to vector<32x32xf32>
    %225 = arith.mulf %220, %224 : vector<32x32xf32>
    %226 = vector.broadcast %206 : vector<1x32xf32> to vector<32x32xf32>
    %227 = arith.mulf %225, %226 : vector<32x32xf32>
    %228 = vector.broadcast %207 : vector<1x32xf32> to vector<32x32xf32>
    %229 = arith.addf %227, %228 : vector<32x32xf32>
    %230 = vector.shape_cast %229 : vector<32x32xf32> to vector<2x16x32xf32>
    %c0_145 = arith.constant 0 : index
    %c0_146 = arith.constant 0 : index
    %c0_147 = arith.constant 0 : index
    %231 = vector.load %arg18[%c0_145, %c0_146, %c0_147] : memref<2x16x32xf32, #tpu.memory_space<vmem>>, vector<2x16x32xf32>
    tpu.vector_store %arg18[%c0_145, %c0_146, %c0_147], %230 {strides = array<i32>} : memref<2x16x32xf32, #tpu.memory_space<vmem>>, vector<2x16x32xf32>,
    return
  }
  func.func @transform_0(%arg0: i32) -> (i32, i32, i32) {
    %c0_i32 = arith.constant 0 : i32
    %c0_i32_0 = arith.constant 0 : i32
    %c0_i32_1 = arith.constant 0 : i32
    return %arg0, %c0_i32, %c0_i32_0 : i32, i32, i32
  }
  func.func @transform_1(%arg0: i32) -> (i32, i32, i32) {
    %c0_i32 = arith.constant 0 : i32
    %c0_i32_0 = arith.constant 0 : i32
    %c0_i32_1 = arith.constant 0 : i32
    %c0_i32_2 = arith.constant 0 : i32
    return %c0_i32, %c0_i32_0, %c0_i32_1 : i32, i32, i32
  }
  func.func @transform_2(%arg0: i32) -> (i32, i32, i32) {
    %c0_i32 = arith.constant 0 : i32
    %c0_i32_0 = arith.constant 0 : i32
    %c0_i32_1 = arith.constant 0 : i32
    %c0_i32_2 = arith.constant 0 : i32
    return %c0_i32, %c0_i32_0, %c0_i32_1 : i32, i32, i32
  }
  func.func @transform_3(%arg0: i32) -> (i32, i32, i32) {
    %c0_i32 = arith.constant 0 : i32
    %c0_i32_0 = arith.constant 0 : i32
    %c0_i32_1 = arith.constant 0 : i32
    %c0_i32_2 = arith.constant 0 : i32
    return %c0_i32, %c0_i32_0, %c0_i32_1 : i32, i32, i32
  }
  func.func @transform_4(%arg0: i32) -> (i32, i32, i32) {
    %c0_i32 = arith.constant 0 : i32
    %c0_i32_0 = arith.constant 0 : i32
    %c0_i32_1 = arith.constant 0 : i32
    %c0_i32_2 = arith.constant 0 : i32
    return %c0_i32, %c0_i32_0, %c0_i32_1 : i32, i32, i32
  }
  func.func @transform_5(%arg0: i32) -> (i32, i32, i32) {
    %c0_i32 = arith.constant 0 : i32
    %c0_i32_0 = arith.constant 0 : i32
    %c0_i32_1 = arith.constant 0 : i32
    %c0_i32_2 = arith.constant 0 : i32
    return %c0_i32, %c0_i32_0, %c0_i32_1 : i32, i32, i32
  }
  func.func @transform_6(%arg0: i32) -> (i32, i32, i32) {
    %c0_i32 = arith.constant 0 : i32
    %c0_i32_0 = arith.constant 0 : i32
    %c0_i32_1 = arith.constant 0 : i32
    %c0_i32_2 = arith.constant 0 : i32
    return %c0_i32, %c0_i32_0, %c0_i32_1 : i32, i32, i32
  }
  func.func @transform_7(%arg0: i32) -> (i32, i32, i32) {
    %c0_i32 = arith.constant 0 : i32
    %c0_i32_0 = arith.constant 0 : i32
    %c0_i32_1 = arith.constant 0 : i32
    %c0_i32_2 = arith.constant 0 : i32
    return %c0_i32, %c0_i32_0, %c0_i32_1 : i32, i32, i32
  }
  func.func @transform_8(%arg0: i32) -> (i32, i32) {
    %c0_i32 = arith.constant 0 : i32
    %c0_i32_0 = arith.constant 0 : i32
    %c0_i32_1 = arith.constant 0 : i32
    return %c0_i32, %c0_i32_0 : i32, i32
  }
  func.func @transform_9(%arg0: i32) -> (i32, i32) {
    %c0_i32 = arith.constant 0 : i32
    %c0_i32_0 = arith.constant 0 : i32
    %c0_i32_1 = arith.constant 0 : i32
    return %c0_i32, %c0_i32_0 : i32, i32
  }
  func.func @transform_10(%arg0: i32) -> (i32, i32) {
    %c0_i32 = arith.constant 0 : i32
    %c0_i32_0 = arith.constant 0 : i32
    %c0_i32_1 = arith.constant 0 : i32
    return %c0_i32, %c0_i32_0 : i32, i32
  }
  func.func @transform_11(%arg0: i32) -> (i32, i32) {
    %c0_i32 = arith.constant 0 : i32
    %c0_i32_0 = arith.constant 0 : i32
    %c0_i32_1 = arith.constant 0 : i32
    return %c0_i32, %c0_i32_0 : i32, i32
  }
  func.func @transform_12(%arg0: i32) -> (i32, i32) {
    %c0_i32 = arith.constant 0 : i32
    %c0_i32_0 = arith.constant 0 : i32
    %c0_i32_1 = arith.constant 0 : i32
    return %c0_i32, %c0_i32_0 : i32, i32
  }
  func.func @transform_13(%arg0: i32) -> (i32, i32) {
    %c0_i32 = arith.constant 0 : i32
    %c0_i32_0 = arith.constant 0 : i32
    %c0_i32_1 = arith.constant 0 : i32
    return %c0_i32, %c0_i32_0 : i32, i32
  }
  func.func @transform_14(%arg0: i32) -> (i32, i32) {
    %c0_i32 = arith.constant 0 : i32
    %c0_i32_0 = arith.constant 0 : i32
    %c0_i32_1 = arith.constant 0 : i32
    return %c0_i32, %c0_i32_0 : i32, i32
  }
  func.func @transform_15(%arg0: i32) -> (i32, i32) {
    %c0_i32 = arith.constant 0 : i32
    %c0_i32_0 = arith.constant 0 : i32
    %c0_i32_1 = arith.constant 0 : i32
    return %c0_i32, %c0_i32_0 : i32, i32
  }
  func.func @transform_16(%arg0: i32) -> (i32, i32) {
    %c0_i32 = arith.constant 0 : i32
    %c0_i32_0 = arith.constant 0 : i32
    %c0_i32_1 = arith.constant 0 : i32
    return %c0_i32, %c0_i32_0 : i32, i32
  }
  func.func @transform_17(%arg0: i32) -> (i32, i32, i32) {
    %c0_i32 = arith.constant 0 : i32
    %c0_i32_0 = arith.constant 0 : i32
    %c0_i32_1 = arith.constant 0 : i32
    return %arg0, %c0_i32, %c0_i32_0 : i32, i32, i32
  }
}

</mosaic_0001>

<llo_original>
// kernel: tpu_custom_call.1
$region0: #{tpu_custom_call.1}
  #allocation0 [shape = 'u32[]', space=smem, size = 0x4, offset = 0x4, fixed_abs, tag = 'smem constant byte address 0x4 - core index']
  #allocation1 [shape = 'u32[72,128]{1,0:T(1,128)}', space=vmem, size = 0x9000, scoped, tag = 'internal scratch']
  %s0 = inlined_call_operand.vmem [shape: f32[2,16,32], index: 0, kind: input, shape index: {}]
  %s1 = inlined_call_operand.vmem [shape: f32[4,32,8], index: 1, kind: input, shape index: {}]
  %s2 = inlined_call_operand.vmem [shape: f32[4,1,8], index: 2, kind: input, shape index: {}]
  %s3 = inlined_call_operand.vmem [shape: f32[4,32,8], index: 3, kind: input, shape index: {}]
  %s4 = inlined_call_operand.vmem [shape: f32[4,1,8], index: 4, kind: input, shape index: {}]
  %s5 = inlined_call_operand.vmem [shape: f32[4,32,8], index: 5, kind: input, shape index: {}]
  %s6 = inlined_call_operand.vmem [shape: f32[4,1,8], index: 6, kind: input, shape index: {}]
  %s7 = inlined_call_operand.vmem [shape: f32[4,8,32], index: 7, kind: input, shape index: {}]
  %s8 = inlined_call_operand.vmem [shape: f32[1,32], index: 8, kind: input, shape index: {}]
  %s9 = inlined_call_operand.vmem [shape: f32[32,128], index: 9, kind: input, shape index: {}]
  %s10 = inlined_call_operand.vmem [shape: f32[1,128], index: 10, kind: input, shape index: {}]
  %s11 = inlined_call_operand.vmem [shape: f32[128,32], index: 11, kind: input, shape index: {}]
  %s12 = inlined_call_operand.vmem [shape: f32[1,32], index: 12, kind: input, shape index: {}]
  %s13 = inlined_call_operand.vmem [shape: f32[1,32], index: 13, kind: input, shape index: {}]
  %s14 = inlined_call_operand.vmem [shape: f32[1,32], index: 14, kind: input, shape index: {}]
  %s15 = inlined_call_operand.vmem [shape: f32[1,32], index: 15, kind: input, shape index: {}]
  %s16 = inlined_call_operand.vmem [shape: f32[1,32], index: 16, kind: input, shape index: {}]
  %s17 = inlined_call_operand.hbm [shape: f32[2,16,32], index: 17, kind: output, shape index: {}]
  %s18 = sld [smem:[#allocation0]]
  $region78: #{tpu_custom_call.1} parent=0
    _
  %s20 = ssub.s32 1, %s18
  %s21 = scalar_select 0, %s20, %s18
  $region1: #{tpu_custom_call.1} parent=0
    #allocation2 [shape = 'u8[16384]{0}', space=vmem, size = 0x4000, scoped, tag = 'output window, operand 0, single buffered']
    #allocation3 [shape = 's32[1]{0}', space=sflag, size = 0x4, scoped, tag = 'scoped memory for tpu_custom_call.1']
    %22 = vsyncpa [#allocation3], 0
    // Predicated region
    $region2: #{tpu_custom_call.1} parent=1 // pred_check
      _
    $region3: #{tpu_custom_call.1} parent=1 // pred_check_branch
      %24 = sbr.rel (0) target = $region5
    $region4: #{tpu_custom_call.1} parent=1 // pred_region
      _
    $region5: #{tpu_custom_call.1} parent=1 // pred_fallthru
      _
    // Predicated region
    $region6: #{tpu_custom_call.1} parent=1 // pred_check
      _
    $region7: #{tpu_custom_call.1} parent=1 // pred_check_branch
      %26 = sbr.rel (0) target = $region9
    $region8: #{tpu_custom_call.1} parent=1 // pred_region
      _
    $region9: #{tpu_custom_call.1} parent=1 // pred_fallthru
      _
    // Predicated region
    $region10: #{tpu_custom_call.1} parent=1 // pred_check
      _
    $region11: #{tpu_custom_call.1} parent=1 // pred_check_branch
      %28 = sbr.rel (0) target = $region13
    $region12: #{tpu_custom_call.1} parent=1 // pred_region
      _
    $region13: #{tpu_custom_call.1} parent=1 // pred_fallthru
      _
    // Predicated region
    $region14: #{tpu_custom_call.1} parent=1 // pred_check
      _
    $region15: #{tpu_custom_call.1} parent=1 // pred_check_branch
      %30 = sbr.rel (0) target = $region17
    $region16: #{tpu_custom_call.1} parent=1 // pred_region
      _
    $region17: #{tpu_custom_call.1} parent=1 // pred_fallthru
      _
    // Predicated region
    $region18: #{tpu_custom_call.1} parent=1 // pred_check
      _
    $region19: #{tpu_custom_call.1} parent=1 // pred_check_branch
      %32 = sbr.rel (0) target = $region21
    $region20: #{tpu_custom_call.1} parent=1 // pred_region
      _
    $region21: #{tpu_custom_call.1} parent=1 // pred_fallthru
      _
    // Predicated region
    $region22: #{tpu_custom_call.1} parent=1 // pred_check
      _
    $region23: #{tpu_custom_call.1} parent=1 // pred_check_branch
      %34 = sbr.rel (0) target = $region25
    $region24: #{tpu_custom_call.1} parent=1 // pred_region
      _
    $region25: #{tpu_custom_call.1} parent=1 // pred_fallthru
      _
    // Predicated region
    $region26: #{tpu_custom_call.1} parent=1 // pred_check
      _
    $region27: #{tpu_custom_call.1} parent=1 // pred_check_branch
      %36 = sbr.rel (0) target = $region29
    $region28: #{tpu_custom_call.1} parent=1 // pred_region
      _
    $region29: #{tpu_custom_call.1} parent=1 // pred_fallthru
      _
    // Predicated region
    $region30: #{tpu_custom_call.1} parent=1 // pred_check
      _
    $region31: #{tpu_custom_call.1} parent=1 // pred_check_branch
      %38 = sbr.rel (0) target = $region33
    $region32: #{tpu_custom_call.1} parent=1 // pred_region
      _
    $region33: #{tpu_custom_call.1} parent=1 // pred_fallthru
      _
    // Predicated region
    $region34: #{tpu_custom_call.1} parent=1 // pred_check
      _
    $region35: #{tpu_custom_call.1} parent=1 // pred_check_branch
      %40 = sbr.rel (0) target = $region37
    $region36: #{tpu_custom_call.1} parent=1 // pred_region
      _
    $region37: #{tpu_custom_call.1} parent=1 // pred_fallthru
      _
    // Predicated region
    $region38: #{tpu_custom_call.1} parent=1 // pred_check
      _
    $region39: #{tpu_custom_call.1} parent=1 // pred_check_branch
      %42 = sbr.rel (0) target = $region41
    $region40: #{tpu_custom_call.1} parent=1 // pred_region
      _
    $region41: #{tpu_custom_call.1} parent=1 // pred_fallthru
      _
    // Predicated region
    $region42: #{tpu_custom_call.1} parent=1 // pred_check
      _
    $region43: #{tpu_custom_call.1} parent=1 // pred_check_branch
      %44 = sbr.rel (0) target = $region45
    $region44: #{tpu_custom_call.1} parent=1 // pred_region
      _
    $region45: #{tpu_custom_call.1} parent=1 // pred_fallthru
      _
    // Predicated region
    $region46: #{tpu_custom_call.1} parent=1 // pred_check
      _
    $region47: #{tpu_custom_call.1} parent=1 // pred_check_branch
      %46 = sbr.rel (0) target = $region49
    $region48: #{tpu_custom_call.1} parent=1 // pred_region
      _
    $region49: #{tpu_custom_call.1} parent=1 // pred_fallthru
      _
    // Predicated region
    $region50: #{tpu_custom_call.1} parent=1 // pred_check
      _
    $region51: #{tpu_custom_call.1} parent=1 // pred_check_branch
      %48 = sbr.rel (0) target = $region53
    $region52: #{tpu_custom_call.1} parent=1 // pred_region
      _
    $region53: #{tpu_custom_call.1} parent=1 // pred_fallthru
      _
    // Predicated region
    $region54: #{tpu_custom_call.1} parent=1 // pred_check
      _
    $region55: #{tpu_custom_call.1} parent=1 // pred_check_branch
      %50 = sbr.rel (0) target = $region57
    $region56: #{tpu_custom_call.1} parent=1 // pred_region
      _
    $region57: #{tpu_custom_call.1} parent=1 // pred_fallthru
      _
    // Predicated region
    $region58: #{tpu_custom_call.1} parent=1 // pred_check
      _
    $region59: #{tpu_custom_call.1} parent=1 // pred_check_branch
      %52 = sbr.rel (0) target = $region61
    $region60: #{tpu_custom_call.1} parent=1 // pred_region
      _
    $region61: #{tpu_custom_call.1} parent=1 // pred_fallthru
      _
    // Predicated region
    $region62: #{tpu_custom_call.1} parent=1 // pred_check
      _
    $region63: #{tpu_custom_call.1} parent=1 // pred_check_branch
      %54 = sbr.rel (0) target = $region65
    $region64: #{tpu_custom_call.1} parent=1 // pred_region
      _
    $region65: #{tpu_custom_call.1} parent=1 // pred_fallthru
      _
    // Predicated region
    $region66: #{tpu_custom_call.1} parent=1 // pred_check
      _
    $region67: #{tpu_custom_call.1} parent=1 // pred_check_branch
      %56 = sbr.rel (0) target = $region69
    $region68: #{tpu_custom_call.1} parent=1 // pred_region
      _
    $region69: #{tpu_custom_call.1} parent=1 // pred_fallthru
      _
    %v57 = vld [vmem:[%s0] sm:$0xff]
    %v58 = vld [vmem:[%s0 + $0x8] sm:$0xff]
    %v59 = vld [vmem:[%s0 + $0x10] sm:$0xff]
    %v60 = vld [vmem:[%s0 + $0x18] sm:$0xff]
    %v61 = vld [vmem:[%s1] sm:$0xff]
    %v62 = vld [vmem:[%s1 + $0x8] sm:$0xff]
    %v63 = vld [vmem:[%s1 + $0x10] sm:$0xff]
    %v64 = vld [vmem:[%s1 + $0x18] sm:$0xff]
    %v65 = vld [vmem:[%s2] sm:$0x1]
    %v67 = vperm.slane %v65, 0
    %vm69 = vcmask 261120
    %v71 = vsel %vm69, %v57, 0
    %v74 = vsel %vm69, %v58, 0
    %v77 = vsel %vm69, %v59, 0
    %v80 = vsel %vm69, %v60, 0
    %82 = vmatpush.msra.mxu0 0.0
    %83 = vmatpush.msra.mxu0 0.0
    %84 = vmatpush.msra.mxu0 0.0
    %85 = vmatpush.msra.mxu0 0.0
    %86 = vmatpush.msra.mxu0 0.0
    %87 = vmatpush.msra.mxu0 0.0
    %88 = vmatpush.msra.mxu0 0.0
    %89 = vmatpush.msra.mxu0 0.0
    %90 = vmatpush.msra.mxu0 0.0
    %91 = vmatpush.msra.mxu0 0.0
    %92 = vmatpush.msra.mxu0 0.0
    %93 = vmatpush.msra.mxu0 0.0
    %94 = vmatpush.msra.mxu0 %v64
    %95 = vmatpush.msra.mxu0 %v63
    %96 = vmatpush.msra.mxu0 %v62
    %97 = vmatpush.msra.mxu0 %v61
    %98 = vmatmul.f32.gmra.mxu0 %v71
    %v99 = vpop.f32.mrf.mxu0
    %v100 = vadd.f32 %v67, %v99
    %101 = vmatmul.f32.gmra.mxu0 %v74
    %v102 = vpop.f32.mrf.mxu0
    %v103 = vadd.f32 %v67, %v102
    %104 = vmatmul.f32.gmra.mxu0 %v77
    %v105 = vpop.f32.mrf.mxu0
    %v106 = vadd.f32 %v67, %v105
    %107 = vmatmul.f32.gmra.mxu0 %v80
    %v108 = vpop.f32.mrf.mxu0
    %v109 = vadd.f32 %v67, %v108
    %110 = vdwg.mxu0
    %v111 = vld [vmem:[%s3] sm:$0xff]
    %v112 = vld [vmem:[%s3 + $0x8] sm:$0xff]
    %v113 = vld [vmem:[%s3 + $0x10] sm:$0xff]
    %v114 = vld [vmem:[%s3 + $0x18] sm:$0xff]
    %v115 = vld [vmem:[%s4] sm:$0x1]
    %v117 = vperm.slane %v115, 0
    %119 = vmatpush.msra.mxu0 0.0
    %120 = vmatpush.msra.mxu0 0.0
    %121 = vmatpush.msra.mxu0 0.0
    %122 = vmatpush.msra.mxu0 0.0
    %123 = vmatpush.msra.mxu0 0.0
    %124 = vmatpush.msra.mxu0 0.0
    %125 = vmatpush.msra.mxu0 0.0
    %126 = vmatpush.msra.mxu0 0.0
    %127 = vmatpush.msra.mxu0 0.0
    %128 = vmatpush.msra.mxu0 0.0
    %129 = vmatpush.msra.mxu0 0.0
    %130 = vmatpush.msra.mxu0 0.0
    %131 = vmatpush.msra.mxu0 %v114
    %132 = vmatpush.msra.mxu0 %v113
    %133 = vmatpush.msra.mxu0 %v112
    %134 = vmatpush.msra.mxu0 %v111
    %135 = vmatmul.f32.gmra.mxu0 %v71
    %v136 = vpop.f32.mrf.mxu0
    %v137 = vadd.f32 %v117, %v136
    %138 = vmatmul.f32.gmra.mxu0 %v74
    %v139 = vpop.f32.mrf.mxu0
    %v140 = vadd.f32 %v117, %v139
    %141 = vmatmul.f32.gmra.mxu0 %v77
    %v142 = vpop.f32.mrf.mxu0
    %v143 = vadd.f32 %v117, %v142
    %144 = vmatmul.f32.gmra.mxu0 %v80
    %v145 = vpop.f32.mrf.mxu0
    %v146 = vadd.f32 %v117, %v145
    %147 = vdwg.mxu0
    %v148 = vld [vmem:[%s5] sm:$0xff]
    %v149 = vld [vmem:[%s5 + $0x8] sm:$0xff]
    %v150 = vld [vmem:[%s5 + $0x10] sm:$0xff]
    %v151 = vld [vmem:[%s5 + $0x18] sm:$0xff]
    %v152 = vld [vmem:[%s6] sm:$0x1]
    %v154 = vperm.slane %v152, 0
    %156 = vmatpush.msra.mxu0 0.0
    %157 = vmatpush.msra.mxu0 0.0
    %158 = vmatpush.msra.mxu0 0.0
    %159 = vmatpush.msra.mxu0 0.0
    %160 = vmatpush.msra.mxu0 0.0
    %161 = vmatpush.msra.mxu0 0.0
    %162 = vmatpush.msra.mxu0 0.0
    %163 = vmatpush.msra.mxu0 0.0
    %164 = vmatpush.msra.mxu0 0.0
    %165 = vmatpush.msra.mxu0 0.0
    %166 = vmatpush.msra.mxu0 0.0
    %167 = vmatpush.msra.mxu0 0.0
    %168 = vmatpush.msra.mxu0 %v151
    %169 = vmatpush.msra.mxu0 %v150
    %170 = vmatpush.msra.mxu0 %v149
    %171 = vmatpush.msra.mxu0 %v148
    %172 = vmatmul.f32.gmra.mxu0 %v71
    %v173 = vpop.f32.mrf.mxu0
    %v174 = vadd.f32 %v154, %v173
    %175 = vmatmul.f32.gmra.mxu0 %v74
    %v176 = vpop.f32.mrf.mxu0
    %v177 = vadd.f32 %v154, %v176
    %178 = vmatmul.f32.gmra.mxu0 %v77
    %v179 = vpop.f32.mrf.mxu0
    %v180 = vadd.f32 %v154, %v179
    %181 = vmatmul.f32.gmra.mxu0 %v80
    %v182 = vpop.f32.mrf.mxu0
    %v183 = vadd.f32 %v154, %v182
    %184 = vdwg.mxu0
    %vm185 = vcmask 64512
    %v187 = vsel %vm185, %v100, 0
    %v190 = vsel %vm185, %v103, 0
    %v193 = vsel %vm185, %v137, 0
    %v196 = vsel %vm185, %v140, 0
    %198 = vmatpush.xpose.msra.mxu0 0.0
    %199 = vmatpush.xpose.msra.mxu0 0.0
    %200 = vmatpush.xpose.msra.mxu0 0.0
    %201 = vmatpush.xpose.msra.mxu0 0.0
    %202 = vmatpush.xpose.msra.mxu0 0.0
    %203 = vmatpush.xpose.msra.mxu0 0.0
    %204 = vmatpush.xpose.msra.mxu0 0.0
    %205 = vmatpush.xpose.msra.mxu0 0.0
    %206 = vmatpush.xpose.msra.mxu0 0.0
    %207 = vmatpush.xpose.msra.mxu0 0.0
    %208 = vmatpush.xpose.msra.mxu0 0.0
    %209 = vmatpush.xpose.msra.mxu0 0.0
    %210 = vmatpush.xpose.msra.mxu0 0.0
    %211 = vmatpush.xpose.msra.mxu0 0.0
    %212 = vmatpush.xpose.msra.mxu0 %v196
    %213 = vmatpush.xpose.msra.mxu0 %v193
    %214 = vmatmul.f32.gmra.mxu0 %v187
    %v215 = vpop.f32.mrf.mxu0
    %v216 = vadd.f32 0.0, %v215
    %217 = vmatmul.f32.gmra.mxu0 %v190
    %v218 = vpop.f32.mrf.mxu0
    %v219 = vadd.f32 0.0, %v218
    %220 = vdwg.mxu0
    %v222 = vsel %vm185, %v106, 0
    %v225 = vsel %vm185, %v109, 0
    %v228 = vsel %vm185, %v143, 0
    %v231 = vsel %vm185, %v146, 0
    %233 = vmatpush.xpose.msra.mxu0 0.0
    %234 = vmatpush.xpose.msra.mxu0 0.0
    %235 = vmatpush.xpose.msra.mxu0 0.0
    %236 = vmatpush.xpose.msra.mxu0 0.0
    %237 = vmatpush.xpose.msra.mxu0 0.0
    %238 = vmatpush.xpose.msra.mxu0 0.0
    %239 = vmatpush.xpose.msra.mxu0 0.0
    %240 = vmatpush.xpose.msra.mxu0 0.0
    %241 = vmatpush.xpose.msra.mxu0 0.0
    %242 = vmatpush.xpose.msra.mxu0 0.0
    %243 = vmatpush.xpose.msra.mxu0 0.0
    %244 = vmatpush.xpose.msra.mxu0 0.0
    %245 = vmatpush.xpose.msra.mxu0 0.0
    %246 = vmatpush.xpose.msra.mxu0 0.0
    %247 = vmatpush.xpose.msra.mxu0 %v231
    %248 = vmatpush.xpose.msra.mxu0 %v228
    %249 = vmatmul.f32.gmra.mxu0 %v222
    %v250 = vpop.f32.mrf.mxu0
    %v251 = vadd.f32 0.0, %v250
    %252 = vmatmul.f32.gmra.mxu0 %v225
    %v253 = vpop.f32.mrf.mxu0
    %v254 = vadd.f32 0.0, %v253
    %255 = vdwg.mxu0
    %vm256 = vcmask 130048
    %v257 = vsel %vm256, %v216, -inf
    %258 = vmax.xlane.f32.xlu0 %v257
    %v259 = vpop.xlane.xlu0 %258
    %v260 = vsel %vm256, %v219, -inf
    %261 = vmax.xlane.f32.xlu0 %v260
    %v262 = vpop.xlane.xlu0 %261
    %v263 = vsel %vm256, %v251, -inf
    %264 = vmax.xlane.f32.xlu0 %v263
    %v265 = vpop.xlane.xlu0 %264
    %v266 = vsel %vm256, %v254, -inf
    %267 = vmax.xlane.f32.xlu0 %v266
    %v268 = vpop.xlane.xlu0 %267
    %v269 = vsub.f32 %v216, %v259
    %v270 = vsub.f32 %v219, %v262
    %v271 = vsub.f32 %v251, %v265
    %v272 = vsub.f32 %v254, %v268
    %v273 = vmul.f32 %v269, 1.442695
    %v274 = vpow.pop %v273
    %v275 = vmul.f32 %v270, 1.442695
    %v276 = vpow.pop %v275
    %v277 = vmul.f32 %v271, 1.442695
    %v278 = vpow.pop %v277
    %v279 = vmul.f32 %v272, 1.442695
    %v280 = vpow.pop %v279
    %v281 = vsel %vm256, %v274, 0.0
    %282 = vadd.xlane.f32.xlu0 %v281
    %v283 = vpop.xlane.xlu0 %282
    %v284 = vsel %vm256, %v276, 0.0
    %285 = vadd.xlane.f32.xlu0 %v284
    %v286 = vpop.xlane.xlu0 %285
    %v287 = vsel %vm256, %v278, 0.0
    %288 = vadd.xlane.f32.xlu0 %v287
    %v289 = vpop.xlane.xlu0 %288
    %v290 = vsel %vm256, %v280, 0.0
    %291 = vadd.xlane.f32.xlu0 %v290
    %v292 = vpop.xlane.xlu0 %291
    %v293 = vrcp.pop %v283
    %v294 = vrcp.pop %v286
    %v295 = vrcp.pop %v289
    %v296 = vrcp.pop %v292
    %v298 = vsel %vm256, %v274, 0
    %v301 = vsel %vm256, %v276, 0
    %303 = vmatpush.msra.mxu0 0.0
    %304 = vmatpush.msra.mxu0 0.0
    %305 = vmatpush.msra.mxu0 0.0
    %306 = vmatpush.msra.mxu0 0.0
    %307 = vmatpush.msra.mxu0 0.0
    %308 = vmatpush.msra.mxu0 0.0
    %309 = vmatpush.msra.mxu0 0.0
    %310 = vmatpush.msra.mxu0 0.0
    %311 = vmatpush.msra.mxu0 0.0
    %312 = vmatpush.msra.mxu0 0.0
    %313 = vmatpush.msra.mxu0 0.0
    %314 = vmatpush.msra.mxu0 0.0
    %315 = vmatpush.msra.mxu0 0.0
    %316 = vmatpush.msra.mxu0 0.0
    %317 = vmatpush.msra.mxu0 %v177
    %318 = vmatpush.msra.mxu0 %v174
    %319 = vmatmul.f32.gmra.mxu0 %v298
    %v320 = vpop.f32.mrf.mxu0
    %v321 = vadd.f32 0.0, %v320
    %322 = vmatmul.f32.gmra.mxu0 %v301
    %v323 = vpop.f32.mrf.mxu0
    %v324 = vadd.f32 0.0, %v323
    %325 = vdwg.mxu0
    %v327 = vsel %vm256, %v278, 0
    %v330 = vsel %vm256, %v280, 0
    %332 = vmatpush.msra.mxu0 0.0
    %333 = vmatpush.msra.mxu0 0.0
    %334 = vmatpush.msra.mxu0 0.0
    %335 = vmatpush.msra.mxu0 0.0
    %336 = vmatpush.msra.mxu0 0.0
    %337 = vmatpush.msra.mxu0 0.0
    %338 = vmatpush.msra.mxu0 0.0
    %339 = vmatpush.msra.mxu0 0.0
    %340 = vmatpush.msra.mxu0 0.0
    %341 = vmatpush.msra.mxu0 0.0
    %342 = vmatpush.msra.mxu0 0.0
    %343 = vmatpush.msra.mxu0 0.0
    %344 = vmatpush.msra.mxu0 0.0
    %345 = vmatpush.msra.mxu0 0.0
    %346 = vmatpush.msra.mxu0 %v183
    %347 = vmatpush.msra.mxu0 %v180
    %348 = vmatmul.f32.gmra.mxu0 %v327
    %v349 = vpop.f32.mrf.mxu0
    %v350 = vadd.f32 0.0, %v349
    %351 = vmatmul.f32.gmra.mxu0 %v330
    %v352 = vpop.f32.mrf.mxu0
    %v353 = vadd.f32 0.0, %v352
    %354 = vdwg.mxu0
    %v355 = vmul.f32 %v321, %v293
    %v356 = vmul.f32 %v324, %v294
    %v357 = vmul.f32 %v350, %v295
    %v358 = vmul.f32 %v353, %v296
    %v359 = vld [vmem:[%s7] sm:$0xff]
    %s360 = scalar_lea.vmem %s1, 32
    %v361 = vld [vmem:[%s360] sm:$0xff]
    %v362 = vld [vmem:[%s360 + $0x8] sm:$0xff]
    %v363 = vld [vmem:[%s360 + $0x10] sm:$0xff]
    %v364 = vld [vmem:[%s360 + $0x18] sm:$0xff]
    %s365 = scalar_lea.vmem %s2, 1
    %v366 = vld [vmem:[%s365] sm:$0x1]
    %v368 = vperm.slane %v366, 0
    %370 = vmatpush.msra.mxu0 0.0
    %371 = vmatpush.msra.mxu0 0.0
    %372 = vmatpush.msra.mxu0 0.0
    %373 = vmatpush.msra.mxu0 0.0
    %374 = vmatpush.msra.mxu0 0.0
    %375 = vmatpush.msra.mxu0 0.0
    %376 = vmatpush.msra.mxu0 0.0
    %377 = vmatpush.msra.mxu0 0.0
    %378 = vmatpush.msra.mxu0 0.0
    %379 = vmatpush.msra.mxu0 0.0
    %380 = vmatpush.msra.mxu0 0.0
    %381 = vmatpush.msra.mxu0 0.0
    %382 = vmatpush.msra.mxu0 %v364
    %383 = vmatpush.msra.mxu0 %v363
    %384 = vmatpush.msra.mxu0 %v362
    %385 = vmatpush.msra.mxu0 %v361
    %386 = vmatmul.f32.gmra.mxu0 %v71
    %v387 = vpop.f32.mrf.mxu0
    %v388 = vadd.f32 %v368, %v387
    %389 = vmatmul.f32.gmra.mxu0 %v74
    %v390 = vpop.f32.mrf.mxu0
    %v391 = vadd.f32 %v368, %v390
    %392 = vmatmul.f32.gmra.mxu0 %v77
    %v393 = vpop.f32.mrf.mxu0
    %v394 = vadd.f32 %v368, %v393
    %395 = vmatmul.f32.gmra.mxu0 %v80
    %v396 = vpop.f32.mrf.mxu0
    %v397 = vadd.f32 %v368, %v396
    %398 = vdwg.mxu0
    %s399 = scalar_lea.vmem %s3, 32
    %v400 = vld [vmem:[%s399] sm:$0xff]
    %v401 = vld [vmem:[%s399 + $0x8] sm:$0xff]
    %v402 = vld [vmem:[%s399 + $0x10] sm:$0xff]
    %v403 = vld [vmem:[%s399 + $0x18] sm:$0xff]
    %s404 = scalar_lea.vmem %s4, 1
    %v405 = vld [vmem:[%s404] sm:$0x1]
    %v407 = vperm.slane %v405, 0
    %409 = vmatpush.msra.mxu0 0.0
    %410 = vmatpush.msra.mxu0 0.0
    %411 = vmatpush.msra.mxu0 0.0
    %412 = vmatpush.msra.mxu0 0.0
    %413 = vmatpush.msra.mxu0 0.0
    %414 = vmatpush.msra.mxu0 0.0
    %415 = vmatpush.msra.mxu0 0.0
    %416 = vmatpush.msra.mxu0 0.0
    %417 = vmatpush.msra.mxu0 0.0
    %418 = vmatpush.msra.mxu0 0.0
    %419 = vmatpush.msra.mxu0 0.0
    %420 = vmatpush.msra.mxu0 0.0
    %421 = vmatpush.msra.mxu0 %v403
    %422 = vmatpush.msra.mxu0 %v402
    %423 = vmatpush.msra.mxu0 %v401
    %424 = vmatpush.msra.mxu0 %v400
    %425 = vmatmul.f32.gmra.mxu0 %v71
    %v426 = vpop.f32.mrf.mxu0
    %v427 = vadd.f32 %v407, %v426
    %428 = vmatmul.f32.gmra.mxu0 %v74
    %v429 = vpop.f32.mrf.mxu0
    %v430 = vadd.f32 %v407, %v429
    %431 = vmatmul.f32.gmra.mxu0 %v77
    %v432 = vpop.f32.mrf.mxu0
    %v433 = vadd.f32 %v407, %v432
    %434 = vmatmul.f32.gmra.mxu0 %v80
    %v435 = vpop.f32.mrf.mxu0
    %v436 = vadd.f32 %v407, %v435
    %437 = vdwg.mxu0
    %s438 = scalar_lea.vmem %s5, 32
    %v439 = vld [vmem:[%s438] sm:$0xff]
    %v440 = vld [vmem:[%s438 + $0x8] sm:$0xff]
    %v441 = vld [vmem:[%s438 + $0x10] sm:$0xff]
    %v442 = vld [vmem:[%s438 + $0x18] sm:$0xff]
    %s443 = scalar_lea.vmem %s6, 1
    %v444 = vld [vmem:[%s443] sm:$0x1]
    %v446 = vperm.slane %v444, 0
    %448 = vmatpush.msra.mxu0 0.0
    %449 = vmatpush.msra.mxu0 0.0
    %450 = vmatpush.msra.mxu0 0.0
    %451 = vmatpush.msra.mxu0 0.0
    %452 = vmatpush.msra.mxu0 0.0
    %453 = vmatpush.msra.mxu0 0.0
    %454 = vmatpush.msra.mxu0 0.0
    %455 = vmatpush.msra.mxu0 0.0
    %456 = vmatpush.msra.mxu0 0.0
    %457 = vmatpush.msra.mxu0 0.0
    %458 = vmatpush.msra.mxu0 0.0
    %459 = vmatpush.msra.mxu0 0.0
    %460 = vmatpush.msra.mxu0 %v442
    %461 = vmatpush.msra.mxu0 %v441
    %462 = vmatpush.msra.mxu0 %v440
    %463 = vmatpush.msra.mxu0 %v439
    %464 = vmatmul.f32.gmra.mxu0 %v71
    %v465 = vpop.f32.mrf.mxu0
    %v466 = vadd.f32 %v446, %v465
    %467 = vmatmul.f32.gmra.mxu0 %v74
    %v468 = vpop.f32.mrf.mxu0
    %v469 = vadd.f32 %v446, %v468
    %470 = vmatmul.f32.gmra.mxu0 %v77
    %v471 = vpop.f32.mrf.mxu0
    %v472 = vadd.f32 %v446, %v471
    %473 = vmatmul.f32.gmra.mxu0 %v80
    %v474 = vpop.f32.mrf.mxu0
    %v475 = vadd.f32 %v446, %v474
    %476 = vdwg.mxu0
    %v478 = vsel %vm185, %v388, 0
    %v481 = vsel %vm185, %v391, 0
    %v484 = vsel %vm185, %v427, 0
    %v487 = vsel %vm185, %v430, 0
    %489 = vmatpush.xpose.msra.mxu0 0.0
    %490 = vmatpush.xpose.msra.mxu0 0.0
    %491 = vmatpush.xpose.msra.mxu0 0.0
    %492 = vmatpush.xpose.msra.mxu0 0.0
    %493 = vmatpush.xpose.msra.mxu0 0.0
    %494 = vmatpush.xpose.msra.mxu0 0.0
    %495 = vmatpush.xpose.msra.mxu0 0.0
    %496 = vmatpush.xpose.msra.mxu0 0.0
    %497 = vmatpush.xpose.msra.mxu0 0.0
    %498 = vmatpush.xpose.msra.mxu0 0.0
    %499 = vmatpush.xpose.msra.mxu0 0.0
    %500 = vmatpush.xpose.msra.mxu0 0.0
    %501 = vmatpush.xpose.msra.mxu0 0.0
    %502 = vmatpush.xpose.msra.mxu0 0.0
    %503 = vmatpush.xpose.msra.mxu0 %v487
    %504 = vmatpush.xpose.msra.mxu0 %v484
    %505 = vmatmul.f32.gmra.mxu0 %v478
    %v506 = vpop.f32.mrf.mxu0
    %v507 = vadd.f32 0.0, %v506
    %508 = vmatmul.f32.gmra.mxu0 %v481
    %v509 = vpop.f32.mrf.mxu0
    %v510 = vadd.f32 0.0, %v509
    %511 = vdwg.mxu0
    %v513 = vsel %vm185, %v394, 0
    %v516 = vsel %vm185, %v397, 0
    %v519 = vsel %vm185, %v433, 0
    %v522 = vsel %vm185, %v436, 0
    %524 = vmatpush.xpose.msra.mxu0 0.0
    %525 = vmatpush.xpose.msra.mxu0 0.0
    %526 = vmatpush.xpose.msra.mxu0 0.0
    %527 = vmatpush.xpose.msra.mxu0 0.0
    %528 = vmatpush.xpose.msra.mxu0 0.0
    %529 = vmatpush.xpose.msra.mxu0 0.0
    %530 = vmatpush.xpose.msra.mxu0 0.0
    %531 = vmatpush.xpose.msra.mxu0 0.0
    %532 = vmatpush.xpose.msra.mxu0 0.0
    %533 = vmatpush.xpose.msra.mxu0 0.0
    %534 = vmatpush.xpose.msra.mxu0 0.0
    %535 = vmatpush.xpose.msra.mxu0 0.0
    %536 = vmatpush.xpose.msra.mxu0 0.0
    %537 = vmatpush.xpose.msra.mxu0 0.0
    %538 = vmatpush.xpose.msra.mxu0 %v522
    %539 = vmatpush.xpose.msra.mxu0 %v519
    %540 = vmatmul.f32.gmra.mxu0 %v513
    %v541 = vpop.f32.mrf.mxu0
    %v542 = vadd.f32 0.0, %v541
    %543 = vmatmul.f32.gmra.mxu0 %v516
    %v544 = vpop.f32.mrf.mxu0
    %v545 = vadd.f32 0.0, %v544
    %546 = vdwg.mxu0
    %v547 = vsel %vm256, %v507, -inf
    %548 = vmax.xlane.f32.xlu0 %v547
    %v549 = vpop.xlane.xlu0 %548
    %v550 = vsel %vm256, %v510, -inf
    %551 = vmax.xlane.f32.xlu0 %v550
    %v552 = vpop.xlane.xlu0 %551
    %v553 = vsel %vm256, %v542, -inf
    %554 = vmax.xlane.f32.xlu0 %v553
    %v555 = vpop.xlane.xlu0 %554
    %v556 = vsel %vm256, %v545, -inf
    %557 = vmax.xlane.f32.xlu0 %v556
    %v558 = vpop.xlane.xlu0 %557
    %v559 = vsub.f32 %v507, %v549
    %v560 = vsub.f32 %v510, %v552
    %v561 = vsub.f32 %v542, %v555
    %v562 = vsub.f32 %v545, %v558
    %v563 = vmul.f32 %v559, 1.442695
    %v564 = vpow.pop %v563
    %v565 = vmul.f32 %v560, 1.442695
    %v566 = vpow.pop %v565
    %v567 = vmul.f32 %v561, 1.442695
    %v568 = vpow.pop %v567
    %v569 = vmul.f32 %v562, 1.442695
    %v570 = vpow.pop %v569
    %v571 = vsel %vm256, %v564, 0.0
    %572 = vadd.xlane.f32.xlu0 %v571
    %v573 = vpop.xlane.xlu0 %572
    %v574 = vsel %vm256, %v566, 0.0
    %575 = vadd.xlane.f32.xlu0 %v574
    %v576 = vpop.xlane.xlu0 %575
    %v577 = vsel %vm256, %v568, 0.0
    %578 = vadd.xlane.f32.xlu0 %v577
    %v579 = vpop.xlane.xlu0 %578
    %v580 = vsel %vm256, %v570, 0.0
    %581 = vadd.xlane.f32.xlu0 %v580
    %v582 = vpop.xlane.xlu0 %581
    %v583 = vrcp.pop %v573
    %v584 = vrcp.pop %v576
    %v585 = vrcp.pop %v579
    %v586 = vrcp.pop %v582
    %v588 = vsel %vm256, %v564, 0
    %v591 = vsel %vm256, %v566, 0
    %593 = vmatpush.msra.mxu0 0.0
    %594 = vmatpush.msra.mxu0 0.0
    %595 = vmatpush.msra.mxu0 0.0
    %596 = vmatpush.msra.mxu0 0.0
    %597 = vmatpush.msra.mxu0 0.0
    %598 = vmatpush.msra.mxu0 0.0
    %599 = vmatpush.msra.mxu0 0.0
    %600 = vmatpush.msra.mxu0 0.0
    %601 = vmatpush.msra.mxu0 0.0
    %602 = vmatpush.msra.mxu0 0.0
    %603 = vmatpush.msra.mxu0 0.0
    %604 = vmatpush.msra.mxu0 0.0
    %605 = vmatpush.msra.mxu0 0.0
    %606 = vmatpush.msra.mxu0 0.0
    %607 = vmatpush.msra.mxu0 %v469
    %608 = vmatpush.msra.mxu0 %v466
    %609 = vmatmul.f32.gmra.mxu0 %v588
    %v610 = vpop.f32.mrf.mxu0
    %v611 = vadd.f32 0.0, %v610
    %612 = vmatmul.f32.gmra.mxu0 %v591
    %v613 = vpop.f32.mrf.mxu0
    %v614 = vadd.f32 0.0, %v613
    %615 = vdwg.mxu0
    %v617 = vsel %vm256, %v568, 0
    %v620 = vsel %vm256, %v570, 0
    %622 = vmatpush.msra.mxu0 0.0
    %623 = vmatpush.msra.mxu0 0.0
    %624 = vmatpush.msra.mxu0 0.0
    %625 = vmatpush.msra.mxu0 0.0
    %626 = vmatpush.msra.mxu0 0.0
    %627 = vmatpush.msra.mxu0 0.0
    %628 = vmatpush.msra.mxu0 0.0
    %629 = vmatpush.msra.mxu0 0.0
    %630 = vmatpush.msra.mxu0 0.0
    %631 = vmatpush.msra.mxu0 0.0
    %632 = vmatpush.msra.mxu0 0.0
    %633 = vmatpush.msra.mxu0 0.0
    %634 = vmatpush.msra.mxu0 0.0
    %635 = vmatpush.msra.mxu0 0.0
    %636 = vmatpush.msra.mxu0 %v475
    %637 = vmatpush.msra.mxu0 %v472
    %638 = vmatmul.f32.gmra.mxu0 %v617
    %v639 = vpop.f32.mrf.mxu0
    %v640 = vadd.f32 0.0, %v639
    %641 = vmatmul.f32.gmra.mxu0 %v620
    %v642 = vpop.f32.mrf.mxu0
    %v643 = vadd.f32 0.0, %v642
    %644 = vdwg.mxu0
    %v645 = vmul.f32 %v611, %v583
    %v646 = vmul.f32 %v614, %v584
    %v647 = vmul.f32 %v640, %v585
    %v648 = vmul.f32 %v643, %v586
    %s649 = scalar_lea.vmem %s7, 8
    %v650 = vld [vmem:[%s649] sm:$0xff]
    %v652 = vsel %vm185, %v645, 0
    %v655 = vsel %vm185, %v646, 0
    %v658 = vsel %vm185, %v647, 0
    %v661 = vsel %vm185, %v648, 0
    %663 = vmatpush.msra.mxu0 0.0
    %664 = vmatpush.msra.mxu0 0.0
    %665 = vmatpush.msra.mxu0 0.0
    %666 = vmatpush.msra.mxu0 0.0
    %667 = vmatpush.msra.mxu0 0.0
    %668 = vmatpush.msra.mxu0 0.0
    %669 = vmatpush.msra.mxu0 0.0
    %670 = vmatpush.msra.mxu0 0.0
    %671 = vmatpush.msra.mxu0 0.0
    %672 = vmatpush.msra.mxu0 0.0
    %673 = vmatpush.msra.mxu0 0.0
    %674 = vmatpush.msra.mxu0 0.0
    %675 = vmatpush.msra.mxu0 0.0
    %676 = vmatpush.msra.mxu0 0.0
    %677 = vmatpush.msra.mxu0 0.0
    %678 = vmatpush.msra.mxu0 %v650
    %679 = vmatmul.f32.gmra.mxu0 %v652
    %v680 = vpop.f32.mrf.mxu0
    %v681 = vadd.f32 0.0, %v680
    %682 = vmatmul.f32.gmra.mxu0 %v655
    %v683 = vpop.f32.mrf.mxu0
    %v684 = vadd.f32 0.0, %v683
    %685 = vmatmul.f32.gmra.mxu0 %v658
    %v686 = vpop.f32.mrf.mxu0
    %v687 = vadd.f32 0.0, %v686
    %688 = vmatmul.f32.gmra.mxu0 %v661
    %v689 = vpop.f32.mrf.mxu0
    %v690 = vadd.f32 0.0, %v689
    %691 = vdwg.mxu0
    %v693 = vsel %vm185, %v355, 0
    %v696 = vsel %vm185, %v356, 0
    %v699 = vsel %vm185, %v357, 0
    %v702 = vsel %vm185, %v358, 0
    %704 = vmatpush.msra.mxu0 0.0
    %705 = vmatpush.msra.mxu0 0.0
    %706 = vmatpush.msra.mxu0 0.0
    %707 = vmatpush.msra.mxu0 0.0
    %708 = vmatpush.msra.mxu0 0.0
    %709 = vmatpush.msra.mxu0 0.0
    %710 = vmatpush.msra.mxu0 0.0
    %711 = vmatpush.msra.mxu0 0.0
    %712 = vmatpush.msra.mxu0 0.0
    %713 = vmatpush.msra.mxu0 0.0
    %714 = vmatpush.msra.mxu0 0.0
    %715 = vmatpush.msra.mxu0 0.0
    %716 = vmatpush.msra.mxu0 0.0
    %717 = vmatpush.msra.mxu0 0.0
    %718 = vmatpush.msra.mxu0 0.0
    %719 = vmatpush.msra.mxu0 %v359
    %720 = vmatmul.f32.gmra.mxu0 %v693
    %v721 = vpop.f32.mrf.mxu0
    %v722 = vadd.f32 %v681, %v721
    %723 = vmatmul.f32.gmra.mxu0 %v696
    %v724 = vpop.f32.mrf.mxu0
    %v725 = vadd.f32 %v684, %v724
    %726 = vmatmul.f32.gmra.mxu0 %v699
    %v727 = vpop.f32.mrf.mxu0
    %v728 = vadd.f32 %v687, %v727
    %729 = vmatmul.f32.gmra.mxu0 %v702
    %v730 = vpop.f32.mrf.mxu0
    %v731 = vadd.f32 %v690, %v730
    %732 = vdwg.mxu0
    %s733 = scalar_lea.vmem %s1, 64
    %v734 = vld [vmem:[%s733] sm:$0xff]
    %v735 = vld [vmem:[%s733 + $0x8] sm:$0xff]
    %v736 = vld [vmem:[%s733 + $0x10] sm:$0xff]
    %v737 = vld [vmem:[%s733 + $0x18] sm:$0xff]
    %s738 = scalar_lea.vmem %s2, 2
    %v739 = vld [vmem:[%s738] sm:$0x1]
    %v741 = vperm.slane %v739, 0
    %743 = vmatpush.msra.mxu0 0.0
    %744 = vmatpush.msra.mxu0 0.0
    %745 = vmatpush.msra.mxu0 0.0
    %746 = vmatpush.msra.mxu0 0.0
    %747 = vmatpush.msra.mxu0 0.0
    %748 = vmatpush.msra.mxu0 0.0
    %749 = vmatpush.msra.mxu0 0.0
    %750 = vmatpush.msra.mxu0 0.0
    %751 = vmatpush.msra.mxu0 0.0
    %752 = vmatpush.msra.mxu0 0.0
    %753 = vmatpush.msra.mxu0 0.0
    %754 = vmatpush.msra.mxu0 0.0
    %755 = vmatpush.msra.mxu0 %v737
    %756 = vmatpush.msra.mxu0 %v736
    %757 = vmatpush.msra.mxu0 %v735
    %758 = vmatpush.msra.mxu0 %v734
    %759 = vmatmul.f32.gmra.mxu0 %v71
    %v760 = vpop.f32.mrf.mxu0
    %v761 = vadd.f32 %v741, %v760
    %762 = vmatmul.f32.gmra.mxu0 %v74
    %v763 = vpop.f32.mrf.mxu0
    %v764 = vadd.f32 %v741, %v763
    %765 = vmatmul.f32.gmra.mxu0 %v77
    %v766 = vpop.f32.mrf.mxu0
    %v767 = vadd.f32 %v741, %v766
    %768 = vmatmul.f32.gmra.mxu0 %v80
    %v769 = vpop.f32.mrf.mxu0
    %v770 = vadd.f32 %v741, %v769
    %771 = vdwg.mxu0
    %s772 = scalar_lea.vmem %s3, 64
    %v773 = vld [vmem:[%s772] sm:$0xff]
    %v774 = vld [vmem:[%s772 + $0x8] sm:$0xff]
    %v775 = vld [vmem:[%s772 + $0x10] sm:$0xff]
    %v776 = vld [vmem:[%s772 + $0x18] sm:$0xff]
    %s777 = scalar_lea.vmem %s4, 2
    %v778 = vld [vmem:[%s777] sm:$0x1]
    %v780 = vperm.slane %v778, 0
    %782 = vmatpush.msra.mxu0 0.0
    %783 = vmatpush.msra.mxu0 0.0
    %784 = vmatpush.msra.mxu0 0.0
    %785 = vmatpush.msra.mxu0 0.0
    %786 = vmatpush.msra.mxu0 0.0
    %787 = vmatpush.msra.mxu0 0.0
    %788 = vmatpush.msra.mxu0 0.0
    %789 = vmatpush.msra.mxu0 0.0
    %790 = vmatpush.msra.mxu0 0.0
    %791 = vmatpush.msra.mxu0 0.0
    %792 = vmatpush.msra.mxu0 0.0
    %793 = vmatpush.msra.mxu0 0.0
    %794 = vmatpush.msra.mxu0 %v776
    %795 = vmatpush.msra.mxu0 %v775
    %796 = vmatpush.msra.mxu0 %v774
    %797 = vmatpush.msra.mxu0 %v773
    %798 = vmatmul.f32.gmra.mxu0 %v71
    %v799 = vpop.f32.mrf.mxu0
    %v800 = vadd.f32 %v780, %v799
    %801 = vmatmul.f32.gmra.mxu0 %v74
    %v802 = vpop.f32.mrf.mxu0
    %v803 = vadd.f32 %v780, %v802
    %804 = vmatmul.f32.gmra.mxu0 %v77
    %v805 = vpop.f32.mrf.mxu0
    %v806 = vadd.f32 %v780, %v805
    %807 = vmatmul.f32.gmra.mxu0 %v80
    %v808 = vpop.f32.mrf.mxu0
    %v809 = vadd.f32 %v780, %v808
    %810 = vdwg.mxu0
    %s811 = scalar_lea.vmem %s5, 64
    %v812 = vld [vmem:[%s811] sm:$0xff]
    %v813 = vld [vmem:[%s811 + $0x8] sm:$0xff]
    %v814 = vld [vmem:[%s811 + $0x10] sm:$0xff]
    %v815 = vld [vmem:[%s811 + $0x18] sm:$0xff]
    %s816 = scalar_lea.vmem %s6, 2
    %v817 = vld [vmem:[%s816] sm:$0x1]
    %v819 = vperm.slane %v817, 0
    %821 = vmatpush.msra.mxu0 0.0
    %822 = vmatpush.msra.mxu0 0.0
    %823 = vmatpush.msra.mxu0 0.0
    %824 = vmatpush.msra.mxu0 0.0
    %825 = vmatpush.msra.mxu0 0.0
    %826 = vmatpush.msra.mxu0 0.0
    %827 = vmatpush.msra.mxu0 0.0
    %828 = vmatpush.msra.mxu0 0.0
    %829 = vmatpush.msra.mxu0 0.0
    %830 = vmatpush.msra.mxu0 0.0
    %831 = vmatpush.msra.mxu0 0.0
    %832 = vmatpush.msra.mxu0 0.0
    %833 = vmatpush.msra.mxu0 %v815
    %834 = vmatpush.msra.mxu0 %v814
    %835 = vmatpush.msra.mxu0 %v813
    %836 = vmatpush.msra.mxu0 %v812
    %837 = vmatmul.f32.gmra.mxu0 %v71
    %v838 = vpop.f32.mrf.mxu0
    %v839 = vadd.f32 %v819, %v838
    %840 = vmatmul.f32.gmra.mxu0 %v74
    %v841 = vpop.f32.mrf.mxu0
    %v842 = vadd.f32 %v819, %v841
    %843 = vmatmul.f32.gmra.mxu0 %v77
    %v844 = vpop.f32.mrf.mxu0
    %v845 = vadd.f32 %v819, %v844
    %846 = vmatmul.f32.gmra.mxu0 %v80
    %v847 = vpop.f32.mrf.mxu0
    %v848 = vadd.f32 %v819, %v847
    %849 = vdwg.mxu0
    %v851 = vsel %vm185, %v761, 0
    %v854 = vsel %vm185, %v764, 0
    %v857 = vsel %vm185, %v800, 0
    %v860 = vsel %vm185, %v803, 0
    %862 = vmatpush.xpose.msra.mxu0 0.0
    %863 = vmatpush.xpose.msra.mxu0 0.0
    %864 = vmatpush.xpose.msra.mxu0 0.0
    %865 = vmatpush.xpose.msra.mxu0 0.0
    %866 = vmatpush.xpose.msra.mxu0 0.0
    %867 = vmatpush.xpose.msra.mxu0 0.0
    %868 = vmatpush.xpose.msra.mxu0 0.0
    %869 = vmatpush.xpose.msra.mxu0 0.0
    %870 = vmatpush.xpose.msra.mxu0 0.0
    %871 = vmatpush.xpose.msra.mxu0 0.0
    %872 = vmatpush.xpose.msra.mxu0 0.0
    %873 = vmatpush.xpose.msra.mxu0 0.0
    %874 = vmatpush.xpose.msra.mxu0 0.0
    %875 = vmatpush.xpose.msra.mxu0 0.0
    %876 = vmatpush.xpose.msra.mxu0 %v860
    %877 = vmatpush.xpose.msra.mxu0 %v857
    %878 = vmatmul.f32.gmra.mxu0 %v851
    %v879 = vpop.f32.mrf.mxu0
    %v880 = vadd.f32 0.0, %v879
    %881 = vmatmul.f32.gmra.mxu0 %v854
    %v882 = vpop.f32.mrf.mxu0
    %v883 = vadd.f32 0.0, %v882
    %884 = vdwg.mxu0
    %v886 = vsel %vm185, %v767, 0
    %v889 = vsel %vm185, %v770, 0
    %v892 = vsel %vm185, %v806, 0
    %v895 = vsel %vm185, %v809, 0
    %897 = vmatpush.xpose.msra.mxu0 0.0
    %898 = vmatpush.xpose.msra.mxu0 0.0
    %899 = vmatpush.xpose.msra.mxu0 0.0
    %900 = vmatpush.xpose.msra.mxu0 0.0
    %901 = vmatpush.xpose.msra.mxu0 0.0
    %902 = vmatpush.xpose.msra.mxu0 0.0
    %903 = vmatpush.xpose.msra.mxu0 0.0
    %904 = vmatpush.xpose.msra.mxu0 0.0
    %905 = vmatpush.xpose.msra.mxu0 0.0
    %906 = vmatpush.xpose.msra.mxu0 0.0
    %907 = vmatpush.xpose.msra.mxu0 0.0
    %908 = vmatpush.xpose.msra.mxu0 0.0
    %909 = vmatpush.xpose.msra.mxu0 0.0
    %910 = vmatpush.xpose.msra.mxu0 0.0
    %911 = vmatpush.xpose.msra.mxu0 %v895
    %912 = vmatpush.xpose.msra.mxu0 %v892
    %913 = vmatmul.f32.gmra.mxu0 %v886
    %v914 = vpop.f32.mrf.mxu0
    %v915 = vadd.f32 0.0, %v914
    %916 = vmatmul.f32.gmra.mxu0 %v889
    %v917 = vpop.f32.mrf.mxu0
    %v918 = vadd.f32 0.0, %v917
    %919 = vdwg.mxu0
    %v920 = vsel %vm256, %v880, -inf
    %921 = vmax.xlane.f32.xlu0 %v920
    %v922 = vpop.xlane.xlu0 %921
    %v923 = vsel %vm256, %v883, -inf
    %924 = vmax.xlane.f32.xlu0 %v923
    %v925 = vpop.xlane.xlu0 %924
    %v926 = vsel %vm256, %v915, -inf
    %927 = vmax.xlane.f32.xlu0 %v926
    %v928 = vpop.xlane.xlu0 %927
    %v929 = vsel %vm256, %v918, -inf
    %930 = vmax.xlane.f32.xlu0 %v929
    %v931 = vpop.xlane.xlu0 %930
    %v932 = vsub.f32 %v880, %v922
    %v933 = vsub.f32 %v883, %v925
    %v934 = vsub.f32 %v915, %v928
    %v935 = vsub.f32 %v918, %v931
    %v936 = vmul.f32 %v932, 1.442695
    %v937 = vpow.pop %v936
    %v938 = vmul.f32 %v933, 1.442695
    %v939 = vpow.pop %v938
    %v940 = vmul.f32 %v934, 1.442695
    %v941 = vpow.pop %v940
    %v942 = vmul.f32 %v935, 1.442695
    %v943 = vpow.pop %v942
    %v944 = vsel %vm256, %v937, 0.0
    %945 = vadd.xlane.f32.xlu0 %v944
    %v946 = vpop.xlane.xlu0 %945
    %v947 = vsel %vm256, %v939, 0.0
    %948 = vadd.xlane.f32.xlu0 %v947
    %v949 = vpop.xlane.xlu0 %948
    %v950 = vsel %vm256, %v941, 0.0
    %951 = vadd.xlane.f32.xlu0 %v950
    %v952 = vpop.xlane.xlu0 %951
    %v953 = vsel %vm256, %v943, 0.0
    %954 = vadd.xlane.f32.xlu0 %v953
    %v955 = vpop.xlane.xlu0 %954
    %v956 = vrcp.pop %v946
    %v957 = vrcp.pop %v949
    %v958 = vrcp.pop %v952
    %v959 = vrcp.pop %v955
    %v961 = vsel %vm256, %v937, 0
    %v964 = vsel %vm256, %v939, 0
    %966 = vmatpush.msra.mxu0 0.0
    %967 = vmatpush.msra.mxu0 0.0
    %968 = vmatpush.msra.mxu0 0.0
    %969 = vmatpush.msra.mxu0 0.0
    %970 = vmatpush.msra.mxu0 0.0
    %971 = vmatpush.msra.mxu0 0.0
    %972 = vmatpush.msra.mxu0 0.0
    %973 = vmatpush.msra.mxu0 0.0
    %974 = vmatpush.msra.mxu0 0.0
    %975 = vmatpush.msra.mxu0 0.0
    %976 = vmatpush.msra.mxu0 0.0
    %977 = vmatpush.msra.mxu0 0.0
    %978 = vmatpush.msra.mxu0 0.0
    %979 = vmatpush.msra.mxu0 0.0
    %980 = vmatpush.msra.mxu0 %v842
    %981 = vmatpush.msra.mxu0 %v839
    %982 = vmatmul.f32.gmra.mxu0 %v961
    %v983 = vpop.f32.mrf.mxu0
    %v984 = vadd.f32 0.0, %v983
    %985 = vmatmul.f32.gmra.mxu0 %v964
    %v986 = vpop.f32.mrf.mxu0
    %v987 = vadd.f32 0.0, %v986
    %988 = vdwg.mxu0
    %v990 = vsel %vm256, %v941, 0
    %v993 = vsel %vm256, %v943, 0
    %995 = vmatpush.msra.mxu0 0.0
    %996 = vmatpush.msra.mxu0 0.0
    %997 = vmatpush.msra.mxu0 0.0
    %998 = vmatpush.msra.mxu0 0.0
    %999 = vmatpush.msra.mxu0 0.0
    %1000 = vmatpush.msra.mxu0 0.0
    %1001 = vmatpush.msra.mxu0 0.0
    %1002 = vmatpush.msra.mxu0 0.0
    %1003 = vmatpush.msra.mxu0 0.0
    %1004 = vmatpush.msra.mxu0 0.0
    %1005 = vmatpush.msra.mxu0 0.0
    %1006 = vmatpush.msra.mxu0 0.0
    %1007 = vmatpush.msra.mxu0 0.0
    %1008 = vmatpush.msra.mxu0 0.0
    %1009 = vmatpush.msra.mxu0 %v848
    %1010 = vmatpush.msra.mxu0 %v845
    %1011 = vmatmul.f32.gmra.mxu0 %v990
    %v1012 = vpop.f32.mrf.mxu0
    %v1013 = vadd.f32 0.0, %v1012
    %1014 = vmatmul.f32.gmra.mxu0 %v993
    %v1015 = vpop.f32.mrf.mxu0
    %v1016 = vadd.f32 0.0, %v1015
    %1017 = vdwg.mxu0
    %v1018 = vmul.f32 %v984, %v956
    %v1019 = vmul.f32 %v987, %v957
    %v1020 = vmul.f32 %v1013, %v958
    %v1021 = vmul.f32 %v1016, %v959
    %s1022 = scalar_lea.vmem %s7, 16
    %v1023 = vld [vmem:[%s1022] sm:$0xff]
    %v1025 = vsel %vm185, %v1018, 0
    %v1028 = vsel %vm185, %v1019, 0
    %v1031 = vsel %vm185, %v1020, 0
    %v1034 = vsel %vm185, %v1021, 0
    %1036 = vmatpush.msra.mxu0 0.0
    %1037 = vmatpush.msra.mxu0 0.0
    %1038 = vmatpush.msra.mxu0 0.0
    %1039 = vmatpush.msra.mxu0 0.0
    %1040 = vmatpush.msra.mxu0 0.0
    %1041 = vmatpush.msra.mxu0 0.0
    %1042 = vmatpush.msra.mxu0 0.0
    %1043 = vmatpush.msra.mxu0 0.0
    %1044 = vmatpush.msra.mxu0 0.0
    %1045 = vmatpush.msra.mxu0 0.0
    %1046 = vmatpush.msra.mxu0 0.0
    %1047 = vmatpush.msra.mxu0 0.0
    %1048 = vmatpush.msra.mxu0 0.0
    %1049 = vmatpush.msra.mxu0 0.0
    %1050 = vmatpush.msra.mxu0 0.0
    %1051 = vmatpush.msra.mxu0 %v1023
    %1052 = vmatmul.f32.gmra.mxu0 %v1025
    %v1053 = vpop.f32.mrf.mxu0
    %v1054 = vadd.f32 0.0, %v1053
    %1055 = vmatmul.f32.gmra.mxu0 %v1028
    %v1056 = vpop.f32.mrf.mxu0
    %v1057 = vadd.f32 0.0, %v1056
    %1058 = vmatmul.f32.gmra.mxu0 %v1031
    %v1059 = vpop.f32.mrf.mxu0
    %v1060 = vadd.f32 0.0, %v1059
    %1061 = vmatmul.f32.gmra.mxu0 %v1034
    %v1062 = vpop.f32.mrf.mxu0
    %v1063 = vadd.f32 0.0, %v1062
    %1064 = vdwg.mxu0
    %v1065 = vadd.f32 %v722, %v1054
    %v1066 = vadd.f32 %v725, %v1057
    %v1067 = vadd.f32 %v728, %v1060
    %v1068 = vadd.f32 %v731, %v1063
    %s1069 = scalar_lea.vmem %s1, 96
    %v1070 = vld [vmem:[%s1069] sm:$0xff]
    %v1071 = vld [vmem:[%s1069 + $0x8] sm:$0xff]
    %v1072 = vld [vmem:[%s1069 + $0x10] sm:$0xff]
    %v1073 = vld [vmem:[%s1069 + $0x18] sm:$0xff]
    %s1074 = scalar_lea.vmem %s2, 3
    %v1075 = vld [vmem:[%s1074] sm:$0x1]
    %v1077 = vperm.slane %v1075, 0
    %1079 = vmatpush.msra.mxu0 0.0
    %1080 = vmatpush.msra.mxu0 0.0
    %1081 = vmatpush.msra.mxu0 0.0
    %1082 = vmatpush.msra.mxu0 0.0
    %1083 = vmatpush.msra.mxu0 0.0
    %1084 = vmatpush.msra.mxu0 0.0
    %1085 = vmatpush.msra.mxu0 0.0
    %1086 = vmatpush.msra.mxu0 0.0
    %1087 = vmatpush.msra.mxu0 0.0
    %1088 = vmatpush.msra.mxu0 0.0
    %1089 = vmatpush.msra.mxu0 0.0
    %1090 = vmatpush.msra.mxu0 0.0
    %1091 = vmatpush.msra.mxu0 %v1073
    %1092 = vmatpush.msra.mxu0 %v1072
    %1093 = vmatpush.msra.mxu0 %v1071
    %1094 = vmatpush.msra.mxu0 %v1070
    %1095 = vmatmul.f32.gmra.mxu0 %v71
    %v1096 = vpop.f32.mrf.mxu0
    %v1097 = vadd.f32 %v1077, %v1096
    %1098 = vmatmul.f32.gmra.mxu0 %v74
    %v1099 = vpop.f32.mrf.mxu0
    %v1100 = vadd.f32 %v1077, %v1099
    %1101 = vmatmul.f32.gmra.mxu0 %v77
    %v1102 = vpop.f32.mrf.mxu0
    %v1103 = vadd.f32 %v1077, %v1102
    %1104 = vmatmul.f32.gmra.mxu0 %v80
    %v1105 = vpop.f32.mrf.mxu0
    %v1106 = vadd.f32 %v1077, %v1105
    %1107 = vdwg.mxu0
    %s1108 = scalar_lea.vmem %s3, 96
    %v1109 = vld [vmem:[%s1108] sm:$0xff]
    %v1110 = vld [vmem:[%s1108 + $0x8] sm:$0xff]
    %v1111 = vld [vmem:[%s1108 + $0x10] sm:$0xff]
    %v1112 = vld [vmem:[%s1108 + $0x18] sm:$0xff]
    %s1113 = scalar_lea.vmem %s4, 3
    %v1114 = vld [vmem:[%s1113] sm:$0x1]
    %v1116 = vperm.slane %v1114, 0
    %1118 = vmatpush.msra.mxu0 0.0
    %1119 = vmatpush.msra.mxu0 0.0
    %1120 = vmatpush.msra.mxu0 0.0
    %1121 = vmatpush.msra.mxu0 0.0
    %1122 = vmatpush.msra.mxu0 0.0
    %1123 = vmatpush.msra.mxu0 0.0
    %1124 = vmatpush.msra.mxu0 0.0
    %1125 = vmatpush.msra.mxu0 0.0
    %1126 = vmatpush.msra.mxu0 0.0
    %1127 = vmatpush.msra.mxu0 0.0
    %1128 = vmatpush.msra.mxu0 0.0
    %1129 = vmatpush.msra.mxu0 0.0
    %1130 = vmatpush.msra.mxu0 %v1112
    %1131 = vmatpush.msra.mxu0 %v1111
    %1132 = vmatpush.msra.mxu0 %v1110
    %1133 = vmatpush.msra.mxu0 %v1109
    %1134 = vmatmul.f32.gmra.mxu0 %v71
    %v1135 = vpop.f32.mrf.mxu0
    %v1136 = vadd.f32 %v1116, %v1135
    %1137 = vmatmul.f32.gmra.mxu0 %v74
    %v1138 = vpop.f32.mrf.mxu0
    %v1139 = vadd.f32 %v1116, %v1138
    %1140 = vmatmul.f32.gmra.mxu0 %v77
    %v1141 = vpop.f32.mrf.mxu0
    %v1142 = vadd.f32 %v1116, %v1141
    %1143 = vmatmul.f32.gmra.mxu0 %v80
    %v1144 = vpop.f32.mrf.mxu0
    %v1145 = vadd.f32 %v1116, %v1144
    %1146 = vdwg.mxu0
    %s1147 = scalar_lea.vmem %s5, 96
    %v1148 = vld [vmem:[%s1147] sm:$0xff]
    %v1149 = vld [vmem:[%s1147 + $0x8] sm:$0xff]
    %v1150 = vld [vmem:[%s1147 + $0x10] sm:$0xff]
    %v1151 = vld [vmem:[%s1147 + $0x18] sm:$0xff]
    %s1152 = scalar_lea.vmem %s6, 3
    %v1153 = vld [vmem:[%s1152] sm:$0x1]
    %v1155 = vperm.slane %v1153, 0
    %1157 = vmatpush.msra.mxu0 0.0
    %1158 = vmatpush.msra.mxu0 0.0
    %1159 = vmatpush.msra.mxu0 0.0
    %1160 = vmatpush.msra.mxu0 0.0
    %1161 = vmatpush.msra.mxu0 0.0
    %1162 = vmatpush.msra.mxu0 0.0
    %1163 = vmatpush.msra.mxu0 0.0
    %1164 = vmatpush.msra.mxu0 0.0
    %1165 = vmatpush.msra.mxu0 0.0
    %1166 = vmatpush.msra.mxu0 0.0
    %1167 = vmatpush.msra.mxu0 0.0
    %1168 = vmatpush.msra.mxu0 0.0
    %1169 = vmatpush.msra.mxu0 %v1151
    %1170 = vmatpush.msra.mxu0 %v1150
    %1171 = vmatpush.msra.mxu0 %v1149
    %1172 = vmatpush.msra.mxu0 %v1148
    %1173 = vmatmul.f32.gmra.mxu0 %v71
    %v1174 = vpop.f32.mrf.mxu0
    %v1175 = vadd.f32 %v1155, %v1174
    %1176 = vmatmul.f32.gmra.mxu0 %v74
    %v1177 = vpop.f32.mrf.mxu0
    %v1178 = vadd.f32 %v1155, %v1177
    %1179 = vmatmul.f32.gmra.mxu0 %v77
    %v1180 = vpop.f32.mrf.mxu0
    %v1181 = vadd.f32 %v1155, %v1180
    %1182 = vmatmul.f32.gmra.mxu0 %v80
    %v1183 = vpop.f32.mrf.mxu0
    %v1184 = vadd.f32 %v1155, %v1183
    %1185 = vdwg.mxu0
    %v1187 = vsel %vm185, %v1097, 0
    %v1190 = vsel %vm185, %v1100, 0
    %v1193 = vsel %vm185, %v1136, 0
    %v1196 = vsel %vm185, %v1139, 0
    %1198 = vmatpush.xpose.msra.mxu0 0.0
    %1199 = vmatpush.xpose.msra.mxu0 0.0
    %1200 = vmatpush.xpose.msra.mxu0 0.0
    %1201 = vmatpush.xpose.msra.mxu0 0.0
    %1202 = vmatpush.xpose.msra.mxu0 0.0
    %1203 = vmatpush.xpose.msra.mxu0 0.0
    %1204 = vmatpush.xpose.msra.mxu0 0.0
    %1205 = vmatpush.xpose.msra.mxu0 0.0
    %1206 = vmatpush.xpose.msra.mxu0 0.0
    %1207 = vmatpush.xpose.msra.mxu0 0.0
    %1208 = vmatpush.xpose.msra.mxu0 0.0
    %1209 = vmatpush.xpose.msra.mxu0 0.0
    %1210 = vmatpush.xpose.msra.mxu0 0.0
    %1211 = vmatpush.xpose.msra.mxu0 0.0
    %1212 = vmatpush.xpose.msra.mxu0 %v1196
    %1213 = vmatpush.xpose.msra.mxu0 %v1193
    %1214 = vmatmul.f32.gmra.mxu0 %v1187
    %v1215 = vpop.f32.mrf.mxu0
    %v1216 = vadd.f32 0.0, %v1215
    %1217 = vmatmul.f32.gmra.mxu0 %v1190
    %v1218 = vpop.f32.mrf.mxu0
    %v1219 = vadd.f32 0.0, %v1218
    %1220 = vdwg.mxu0
    %v1222 = vsel %vm185, %v1103, 0
    %v1225 = vsel %vm185, %v1106, 0
    %v1228 = vsel %vm185, %v1142, 0
    %v1231 = vsel %vm185, %v1145, 0
    %1233 = vmatpush.xpose.msra.mxu0 0.0
    %1234 = vmatpush.xpose.msra.mxu0 0.0
    %1235 = vmatpush.xpose.msra.mxu0 0.0
    %1236 = vmatpush.xpose.msra.mxu0 0.0
    %1237 = vmatpush.xpose.msra.mxu0 0.0
    %1238 = vmatpush.xpose.msra.mxu0 0.0
    %1239 = vmatpush.xpose.msra.mxu0 0.0
    %1240 = vmatpush.xpose.msra.mxu0 0.0
    %1241 = vmatpush.xpose.msra.mxu0 0.0
    %1242 = vmatpush.xpose.msra.mxu0 0.0
    %1243 = vmatpush.xpose.msra.mxu0 0.0
    %1244 = vmatpush.xpose.msra.mxu0 0.0
    %1245 = vmatpush.xpose.msra.mxu0 0.0
    %1246 = vmatpush.xpose.msra.mxu0 0.0
    %1247 = vmatpush.xpose.msra.mxu0 %v1231
    %1248 = vmatpush.xpose.msra.mxu0 %v1228
    %1249 = vmatmul.f32.gmra.mxu0 %v1222
    %v1250 = vpop.f32.mrf.mxu0
    %v1251 = vadd.f32 0.0, %v1250
    %1252 = vmatmul.f32.gmra.mxu0 %v1225
    %v1253 = vpop.f32.mrf.mxu0
    %v1254 = vadd.f32 0.0, %v1253
    %1255 = vdwg.mxu0
    %v1256 = vsel %vm256, %v1216, -inf
    %1257 = vmax.xlane.f32.xlu0 %v1256
    %v1258 = vpop.xlane.xlu0 %1257
    %v1259 = vsel %vm256, %v1219, -inf
    %1260 = vmax.xlane.f32.xlu0 %v1259
    %v1261 = vpop.xlane.xlu0 %1260
    %v1262 = vsel %vm256, %v1251, -inf
    %1263 = vmax.xlane.f32.xlu0 %v1262
    %v1264 = vpop.xlane.xlu0 %1263
    %v1265 = vsel %vm256, %v1254, -inf
    %1266 = vmax.xlane.f32.xlu0 %v1265
    %v1267 = vpop.xlane.xlu0 %1266
    %v1268 = vsub.f32 %v1216, %v1258
    %v1269 = vsub.f32 %v1219, %v1261
    %v1270 = vsub.f32 %v1251, %v1264
    %v1271 = vsub.f32 %v1254, %v1267
    %v1272 = vmul.f32 %v1268, 1.442695
    %v1273 = vpow.pop %v1272
    %v1274 = vmul.f32 %v1269, 1.442695
    %v1275 = vpow.pop %v1274
    %v1276 = vmul.f32 %v1270, 1.442695
    %v1277 = vpow.pop %v1276
    %v1278 = vmul.f32 %v1271, 1.442695
    %v1279 = vpow.pop %v1278
    %v1280 = vsel %vm256, %v1273, 0.0
    %1281 = vadd.xlane.f32.xlu0 %v1280
    %v1282 = vpop.xlane.xlu0 %1281
    %v1283 = vsel %vm256, %v1275, 0.0
    %1284 = vadd.xlane.f32.xlu0 %v1283
    %v1285 = vpop.xlane.xlu0 %1284
    %v1286 = vsel %vm256, %v1277, 0.0
    %1287 = vadd.xlane.f32.xlu0 %v1286
    %v1288 = vpop.xlane.xlu0 %1287
    %v1289 = vsel %vm256, %v1279, 0.0
    %1290 = vadd.xlane.f32.xlu0 %v1289
    %v1291 = vpop.xlane.xlu0 %1290
    %v1292 = vrcp.pop %v1282
    %v1293 = vrcp.pop %v1285
    %v1294 = vrcp.pop %v1288
    %v1295 = vrcp.pop %v1291
    %v1297 = vsel %vm256, %v1273, 0
    %v1300 = vsel %vm256, %v1275, 0
    %1302 = vmatpush.msra.mxu0 0.0
    %1303 = vmatpush.msra.mxu0 0.0
    %1304 = vmatpush.msra.mxu0 0.0
    %1305 = vmatpush.msra.mxu0 0.0
    %1306 = vmatpush.msra.mxu0 0.0
    %1307 = vmatpush.msra.mxu0 0.0
    %1308 = vmatpush.msra.mxu0 0.0
    %1309 = vmatpush.msra.mxu0 0.0
    %1310 = vmatpush.msra.mxu0 0.0
    %1311 = vmatpush.msra.mxu0 0.0
    %1312 = vmatpush.msra.mxu0 0.0
    %1313 = vmatpush.msra.mxu0 0.0
    %1314 = vmatpush.msra.mxu0 0.0
    %1315 = vmatpush.msra.mxu0 0.0
    %1316 = vmatpush.msra.mxu0 %v1178
    %1317 = vmatpush.msra.mxu0 %v1175
    %1318 = vmatmul.f32.gmra.mxu0 %v1297
    %v1319 = vpop.f32.mrf.mxu0
    %v1320 = vadd.f32 0.0, %v1319
    %1321 = vmatmul.f32.gmra.mxu0 %v1300
    %v1322 = vpop.f32.mrf.mxu0
    %v1323 = vadd.f32 0.0, %v1322
    %1324 = vdwg.mxu0
    %v1326 = vsel %vm256, %v1277, 0
    %v1329 = vsel %vm256, %v1279, 0
    %1331 = vmatpush.msra.mxu0 0.0
    %1332 = vmatpush.msra.mxu0 0.0
    %1333 = vmatpush.msra.mxu0 0.0
    %1334 = vmatpush.msra.mxu0 0.0
    %1335 = vmatpush.msra.mxu0 0.0
    %1336 = vmatpush.msra.mxu0 0.0
    %1337 = vmatpush.msra.mxu0 0.0
    %1338 = vmatpush.msra.mxu0 0.0
    %1339 = vmatpush.msra.mxu0 0.0
    %1340 = vmatpush.msra.mxu0 0.0
    %1341 = vmatpush.msra.mxu0 0.0
    %1342 = vmatpush.msra.mxu0 0.0
    %1343 = vmatpush.msra.mxu0 0.0
    %1344 = vmatpush.msra.mxu0 0.0
    %1345 = vmatpush.msra.mxu0 %v1184
    %1346 = vmatpush.msra.mxu0 %v1181
    %1347 = vmatmul.f32.gmra.mxu0 %v1326
    %v1348 = vpop.f32.mrf.mxu0
    %v1349 = vadd.f32 0.0, %v1348
    %1350 = vmatmul.f32.gmra.mxu0 %v1329
    %v1351 = vpop.f32.mrf.mxu0
    %v1352 = vadd.f32 0.0, %v1351
    %1353 = vdwg.mxu0
    %v1354 = vmul.f32 %v1320, %v1292
    %v1355 = vmul.f32 %v1323, %v1293
    %v1356 = vmul.f32 %v1349, %v1294
    %v1357 = vmul.f32 %v1352, %v1295
    %s1358 = scalar_lea.vmem %s7, 24
    %v1359 = vld [vmem:[%s1358] sm:$0xff]
    %v1361 = vsel %vm185, %v1354, 0
    %v1364 = vsel %vm185, %v1355, 0
    %v1367 = vsel %vm185, %v1356, 0
    %v1370 = vsel %vm185, %v1357, 0
    %1372 = vmatpush.msra.mxu0 0.0
    %1373 = vmatpush.msra.mxu0 0.0
    %1374 = vmatpush.msra.mxu0 0.0
    %1375 = vmatpush.msra.mxu0 0.0
    %1376 = vmatpush.msra.mxu0 0.0
    %1377 = vmatpush.msra.mxu0 0.0
    %1378 = vmatpush.msra.mxu0 0.0
    %1379 = vmatpush.msra.mxu0 0.0
    %1380 = vmatpush.msra.mxu0 0.0
    %1381 = vmatpush.msra.mxu0 0.0
    %1382 = vmatpush.msra.mxu0 0.0
    %1383 = vmatpush.msra.mxu0 0.0
    %1384 = vmatpush.msra.mxu0 0.0
    %1385 = vmatpush.msra.mxu0 0.0
    %1386 = vmatpush.msra.mxu0 0.0
    %1387 = vmatpush.msra.mxu0 %v1359
    %1388 = vmatmul.f32.gmra.mxu0 %v1361
    %v1389 = vpop.f32.mrf.mxu0
    %v1390 = vadd.f32 0.0, %v1389
    %1391 = vmatmul.f32.gmra.mxu0 %v1364
    %v1392 = vpop.f32.mrf.mxu0
    %v1393 = vadd.f32 0.0, %v1392
    %1394 = vmatmul.f32.gmra.mxu0 %v1367
    %v1395 = vpop.f32.mrf.mxu0
    %v1396 = vadd.f32 0.0, %v1395
    %1397 = vmatmul.f32.gmra.mxu0 %v1370
    %v1398 = vpop.f32.mrf.mxu0
    %v1399 = vadd.f32 0.0, %v1398
    %1400 = vdwg.mxu0
    %v1401 = vadd.f32 %v1065, %v1390
    %v1402 = vadd.f32 %v1066, %v1393
    %v1403 = vadd.f32 %v1067, %v1396
    %v1404 = vadd.f32 %v1068, %v1399
    %v1405 = vld [vmem:[%s8] sm:$0x1]
    %v1407 = vperm.slane %v1405, 0
    %v1409 = vadd.f32 %v1401, %v1407
    %v1410 = vadd.f32 %v1402, %v1407
    %v1411 = vadd.f32 %v1403, %v1407
    %v1412 = vadd.f32 %v1404, %v1407
    %v1413 = vadd.f32 %v57, %v1409
    %v1414 = vadd.f32 %v58, %v1410
    %v1415 = vadd.f32 %v59, %v1411
    %v1416 = vadd.f32 %v60, %v1412
    %v1417 = vld [vmem:[%s13] sm:$0x1]
    %v1418 = vld [vmem:[%s14] sm:$0x1]
    %v1419 = vsel %vm69, %v1413, 0.0
    %1420 = vadd.xlane.f32.xlu0 %v1419
    %v1421 = vpop.xlane.xlu0 %1420
    %v1422 = vsel %vm69, %v1414, 0.0
    %1423 = vadd.xlane.f32.xlu0 %v1422
    %v1424 = vpop.xlane.xlu0 %1423
    %v1425 = vsel %vm69, %v1415, 0.0
    %1426 = vadd.xlane.f32.xlu0 %v1425
    %v1427 = vpop.xlane.xlu0 %1426
    %v1428 = vsel %vm69, %v1416, 0.0
    %1429 = vadd.xlane.f32.xlu0 %v1428
    %v1430 = vpop.xlane.xlu0 %1429
    %v1431 = vrcp.pop 32.0
    %v1432 = vmul.f32 32.0, %v1431
    %v1433 = vsub.f32 1.0, %v1432
    %v1434 = vmul.f32 %v1431, %v1433
    %v1435 = vadd.f32 %v1431, %v1434
    %vm1436 = vweird.f32 %v1431
    %v1437 = vsel %vm1436, %v1431, %v1435
    %v1438 = vmul.f32 %v1421, %v1437
    %v1439 = vmul.f32 %v1424, %v1437
    %v1440 = vmul.f32 %v1427, %v1437
    %v1441 = vmul.f32 %v1430, %v1437
    %v1442 = vmul.f32 %v1413, %v1413
    %v1443 = vmul.f32 %v1414, %v1414
    %v1444 = vmul.f32 %v1415, %v1415
    %v1445 = vmul.f32 %v1416, %v1416
    %v1446 = vsel %vm69, %v1442, 0.0
    %1447 = vadd.xlane.f32.xlu0 %v1446
    %v1448 = vpop.xlane.xlu0 %1447
    %v1449 = vsel %vm69, %v1443, 0.0
    %1450 = vadd.xlane.f32.xlu0 %v1449
    %v1451 = vpop.xlane.xlu0 %1450
    %v1452 = vsel %vm69, %v1444, 0.0
    %1453 = vadd.xlane.f32.xlu0 %v1452
    %v1454 = vpop.xlane.xlu0 %1453
    %v1455 = vsel %vm69, %v1445, 0.0
    %1456 = vadd.xlane.f32.xlu0 %v1455
    %v1457 = vpop.xlane.xlu0 %1456
    %v1458 = vmul.f32 %v1448, %v1437
    %v1459 = vmul.f32 %v1451, %v1437
    %v1460 = vmul.f32 %v1454, %v1437
    %v1461 = vmul.f32 %v1457, %v1437
    %v1462 = vmul.f32 %v1438, %v1438
    %v1463 = vmul.f32 %v1439, %v1439
    %v1464 = vmul.f32 %v1440, %v1440
    %v1465 = vmul.f32 %v1441, %v1441
    %v1466 = vsub.f32 %v1458, %v1462
    %v1467 = vsub.f32 %v1459, %v1463
    %v1468 = vsub.f32 %v1460, %v1464
    %v1469 = vsub.f32 %v1461, %v1465
    %v1470 = vsub.f32 %v1413, %v1438
    %v1471 = vsub.f32 %v1414, %v1439
    %v1472 = vsub.f32 %v1415, %v1440
    %v1473 = vsub.f32 %v1416, %v1441
    %v1474 = vadd.f32 %v1466, 1e-05
    %v1475 = vadd.f32 %v1467, 1e-05
    %v1476 = vadd.f32 %v1468, 1e-05
    %v1477 = vadd.f32 %v1469, 1e-05
    %v1478 = vrsqrt.pop %v1474
    %v1479 = vmul.f32 %v1478, %v1474
    %v1480 = vmul.f32 %v1479, %v1478
    %v1481 = vmul.f32 0.5, %v1480
    %v1482 = vsub.f32 1.5, %v1481
    %v1483 = vmul.f32 %v1478, %v1482
    %vm1484 = vweird.f32 %v1474
    %vm1485 = vweird.f32 %v1478
    %vm1486 = vmor %vm1484, %vm1485
    %v1487 = vsel %vm1486, %v1478, %v1483
    %v1488 = vrsqrt.pop %v1475
    %v1489 = vmul.f32 %v1488, %v1475
    %v1490 = vmul.f32 %v1489, %v1488
    %v1491 = vmul.f32 0.5, %v1490
    %v1492 = vsub.f32 1.5, %v1491
    %v1493 = vmul.f32 %v1488, %v1492
    %vm1494 = vweird.f32 %v1475
    %vm1495 = vweird.f32 %v1488
    %vm1496 = vmor %vm1494, %vm1495
    %v1497 = vsel %vm1496, %v1488, %v1493
    %v1498 = vrsqrt.pop %v1476
    %v1499 = vmul.f32 %v1498, %v1476
    %v1500 = vmul.f32 %v1499, %v1498
    %v1501 = vmul.f32 0.5, %v1500
    %v1502 = vsub.f32 1.5, %v1501
    %v1503 = vmul.f32 %v1498, %v1502
    %vm1504 = vweird.f32 %v1476
    %vm1505 = vweird.f32 %v1498
    %vm1506 = vmor %vm1504, %vm1505
    %v1507 = vsel %vm1506, %v1498, %v1503
    %v1508 = vrsqrt.pop %v1477
    %v1509 = vmul.f32 %v1508, %v1477
    %v1510 = vmul.f32 %v1509, %v1508
    %v1511 = vmul.f32 0.5, %v1510
    %v1512 = vsub.f32 1.5, %v1511
    %v1513 = vmul.f32 %v1508, %v1512
    %vm1514 = vweird.f32 %v1477
    %vm1515 = vweird.f32 %v1508
    %vm1516 = vmor %vm1514, %vm1515
    %v1517 = vsel %vm1516, %v1508, %v1513
    %v1518 = vmul.f32 %v1470, %v1487
    %v1519 = vmul.f32 %v1471, %v1497
    %v1520 = vmul.f32 %v1472, %v1507
    %v1521 = vmul.f32 %v1473, %v1517
    %v1523 = vperm.slane %v1417, 0
    %v1525 = vmul.f32 %v1518, %v1523
    %v1526 = vmul.f32 %v1519, %v1523
    %v1527 = vmul.f32 %v1520, %v1523
    %v1528 = vmul.f32 %v1521, %v1523
    %v1530 = vperm.slane %v1418, 0
    %v1532 = vadd.f32 %v1525, %v1530
    %v1533 = vadd.f32 %v1526, %v1530
    %v1534 = vadd.f32 %v1527, %v1530
    %v1535 = vadd.f32 %v1528, %v1530
    %v1536 = vld [vmem:[%s9] sm:$0xff]
    %v1537 = vld [vmem:[%s9 + $0x8] sm:$0xff]
    %v1538 = vld [vmem:[%s9 + $0x10] sm:$0xff]
    %v1539 = vld [vmem:[%s9 + $0x18] sm:$0xff]
    %v1540 = vld [vmem:[%s10] sm:$0x1]
    %v1542 = vperm.slane %v1540, 0
    %v1545 = vsel %vm69, %v1532, 0
    %v1548 = vsel %vm69, %v1533, 0
    %v1551 = vsel %vm69, %v1534, 0
    %v1554 = vsel %vm69, %v1535, 0
    %1556 = vmatpush.msra.mxu0 0.0
    %1557 = vmatpush.msra.mxu0 0.0
    %1558 = vmatpush.msra.mxu0 0.0
    %1559 = vmatpush.msra.mxu0 0.0
    %1560 = vmatpush.msra.mxu0 0.0
    %1561 = vmatpush.msra.mxu0 0.0
    %1562 = vmatpush.msra.mxu0 0.0
    %1563 = vmatpush.msra.mxu0 0.0
    %1564 = vmatpush.msra.mxu0 0.0
    %1565 = vmatpush.msra.mxu0 0.0
    %1566 = vmatpush.msra.mxu0 0.0
    %1567 = vmatpush.msra.mxu0 0.0
    %1568 = vmatpush.msra.mxu0 %v1539
    %1569 = vmatpush.msra.mxu0 %v1538
    %1570 = vmatpush.msra.mxu0 %v1537
    %1571 = vmatpush.msra.mxu0 %v1536
    %1572 = vmatmul.f32.gmra.mxu0 %v1545
    %v1573 = vpop.f32.mrf.mxu0
    %v1574 = vadd.f32 %v1542, %v1573
    %1575 = vmatmul.f32.gmra.mxu0 %v1548
    %v1576 = vpop.f32.mrf.mxu0
    %v1577 = vadd.f32 %v1542, %v1576
    %1578 = vmatmul.f32.gmra.mxu0 %v1551
    %v1579 = vpop.f32.mrf.mxu0
    %v1580 = vadd.f32 %v1542, %v1579
    %1581 = vmatmul.f32.gmra.mxu0 %v1554
    %v1582 = vpop.f32.mrf.mxu0
    %v1583 = vadd.f32 %v1542, %v1582
    %1584 = vdwg.mxu0
    %v1585 = vmax.f32 %v1574, 0.0
    %v1586 = vmax.f32 %v1577, 0.0
    %v1587 = vmax.f32 %v1580, 0.0
    %v1588 = vmax.f32 %v1583, 0.0
    %v1589 = vld [vmem:[%s11] sm:$0xff]
    %v1590 = vld [vmem:[%s11 + $0x8] sm:$0xff]
    %v1591 = vld [vmem:[%s11 + $0x10] sm:$0xff]
    %v1592 = vld [vmem:[%s11 + $0x18] sm:$0xff]
    %v1593 = vld [vmem:[%s11 + $0x20] sm:$0xff]
    %v1594 = vld [vmem:[%s11 + $0x28] sm:$0xff]
    %v1595 = vld [vmem:[%s11 + $0x30] sm:$0xff]
    %v1596 = vld [vmem:[%s11 + $0x38] sm:$0xff]
    %v1597 = vld [vmem:[%s11 + $0x40] sm:$0xff]
    %v1598 = vld [vmem:[%s11 + $0x48] sm:$0xff]
    %v1599 = vld [vmem:[%s11 + $0x50] sm:$0xff]
    %v1600 = vld [vmem:[%s11 + $0x58] sm:$0xff]
    %v1601 = vld [vmem:[%s11 + $0x60] sm:$0xff]
    %v1602 = vld [vmem:[%s11 + $0x68] sm:$0xff]
    %v1603 = vld [vmem:[%s11 + $0x70] sm:$0xff]
    %v1604 = vld [vmem:[%s11 + $0x78] sm:$0xff]
    %v1605 = vld [vmem:[%s12] sm:$0x1]
    %v1607 = vperm.slane %v1605, 0
    %1609 = vmatpush.msra.mxu0 %v1604
    %1610 = vmatpush.msra.mxu0 %v1603
    %1611 = vmatpush.msra.mxu0 %v1602
    %1612 = vmatpush.msra.mxu0 %v1601
    %1613 = vmatpush.msra.mxu0 %v1600
    %1614 = vmatpush.msra.mxu0 %v1599
    %1615 = vmatpush.msra.mxu0 %v1598
    %1616 = vmatpush.msra.mxu0 %v1597
    %1617 = vmatpush.msra.mxu0 %v1596
    %1618 = vmatpush.msra.mxu0 %v1595
    %1619 = vmatpush.msra.mxu0 %v1594
    %1620 = vmatpush.msra.mxu0 %v1593
    %1621 = vmatpush.msra.mxu0 %v1592
    %1622 = vmatpush.msra.mxu0 %v1591
    %1623 = vmatpush.msra.mxu0 %v1590
    %1624 = vmatpush.msra.mxu0 %v1589
    %1625 = vmatmul.f32.gmra.mxu0 %v1585
    %v1626 = vpop.f32.mrf.mxu0
    %v1627 = vadd.f32 %v1607, %v1626
    %1628 = vmatmul.f32.gmra.mxu0 %v1586
    %v1629 = vpop.f32.mrf.mxu0
    %v1630 = vadd.f32 %v1607, %v1629
    %1631 = vmatmul.f32.gmra.mxu0 %v1587
    %v1632 = vpop.f32.mrf.mxu0
    %v1633 = vadd.f32 %v1607, %v1632
    %1634 = vmatmul.f32.gmra.mxu0 %v1588
    %v1635 = vpop.f32.mrf.mxu0
    %v1636 = vadd.f32 %v1607, %v1635
    %1637 = vdwg.mxu0
    %v1638 = vadd.f32 %v1532, %v1627
    %v1639 = vadd.f32 %v1533, %v1630
    %v1640 = vadd.f32 %v1534, %v1633
    %v1641 = vadd.f32 %v1535, %v1636
    %v1642 = vld [vmem:[%s15] sm:$0x1]
    %v1643 = vld [vmem:[%s16] sm:$0x1]
    %v1644 = vsel %vm69, %v1638, 0.0
    %1645 = vadd.xlane.f32.xlu0 %v1644
    %v1646 = vpop.xlane.xlu0 %1645
    %v1647 = vsel %vm69, %v1639, 0.0
    %1648 = vadd.xlane.f32.xlu0 %v1647
    %v1649 = vpop.xlane.xlu0 %1648
    %v1650 = vsel %vm69, %v1640, 0.0
    %1651 = vadd.xlane.f32.xlu0 %v1650
    %v1652 = vpop.xlane.xlu0 %1651
    %v1653 = vsel %vm69, %v1641, 0.0
    %1654 = vadd.xlane.f32.xlu0 %v1653
    %v1655 = vpop.xlane.xlu0 %1654
    %v1656 = vmul.f32 %v1646, %v1437
    %v1657 = vmul.f32 %v1649, %v1437
    %v1658 = vmul.f32 %v1652, %v1437
    %v1659 = vmul.f32 %v1655, %v1437
    %v1660 = vmul.f32 %v1638, %v1638
    %v1661 = vmul.f32 %v1639, %v1639
    %v1662 = vmul.f32 %v1640, %v1640
    %v1663 = vmul.f32 %v1641, %v1641
    %v1664 = vsel %vm69, %v1660, 0.0
    %1665 = vadd.xlane.f32.xlu0 %v1664
    %v1666 = vpop.xlane.xlu0 %1665
    %v1667 = vsel %vm69, %v1661, 0.0
    %1668 = vadd.xlane.f32.xlu0 %v1667
    %v1669 = vpop.xlane.xlu0 %1668
    %v1670 = vsel %vm69, %v1662, 0.0
    %1671 = vadd.xlane.f32.xlu0 %v1670
    %v1672 = vpop.xlane.xlu0 %1671
    %v1673 = vsel %vm69, %v1663, 0.0
    %1674 = vadd.xlane.f32.xlu0 %v1673
    %v1675 = vpop.xlane.xlu0 %1674
    %v1676 = vmul.f32 %v1666, %v1437
    %v1677 = vmul.f32 %v1669, %v1437
    %v1678 = vmul.f32 %v1672, %v1437
    %v1679 = vmul.f32 %v1675, %v1437
    %v1680 = vmul.f32 %v1656, %v1656
    %v1681 = vmul.f32 %v1657, %v1657
    %v1682 = vmul.f32 %v1658, %v1658
    %v1683 = vmul.f32 %v1659, %v1659
    %v1684 = vsub.f32 %v1676, %v1680
    %v1685 = vsub.f32 %v1677, %v1681
    %v1686 = vsub.f32 %v1678, %v1682
    %v1687 = vsub.f32 %v1679, %v1683
    %v1688 = vsub.f32 %v1638, %v1656
    %v1689 = vsub.f32 %v1639, %v1657
    %v1690 = vsub.f32 %v1640, %v1658
    %v1691 = vsub.f32 %v1641, %v1659
    %v1692 = vadd.f32 %v1684, 1e-05
    %v1693 = vadd.f32 %v1685, 1e-05
    %v1694 = vadd.f32 %v1686, 1e-05
    %v1695 = vadd.f32 %v1687, 1e-05
    %v1696 = vrsqrt.pop %v1692
    %v1697 = vmul.f32 %v1696, %v1692
    %v1698 = vmul.f32 %v1697, %v1696
    %v1699 = vmul.f32 0.5, %v1698
    %v1700 = vsub.f32 1.5, %v1699
    %v1701 = vmul.f32 %v1696, %v1700
    %vm1702 = vweird.f32 %v1692
    %vm1703 = vweird.f32 %v1696
    %vm1704 = vmor %vm1702, %vm1703
    %v1705 = vsel %vm1704, %v1696, %v1701
    %v1706 = vrsqrt.pop %v1693
    %v1707 = vmul.f32 %v1706, %v1693
    %v1708 = vmul.f32 %v1707, %v1706
    %v1709 = vmul.f32 0.5, %v1708
    %v1710 = vsub.f32 1.5, %v1709
    %v1711 = vmul.f32 %v1706, %v1710
    %vm1712 = vweird.f32 %v1693
    %vm1713 = vweird.f32 %v1706
    %vm1714 = vmor %vm1712, %vm1713
    %v1715 = vsel %vm1714, %v1706, %v1711
    %v1716 = vrsqrt.pop %v1694
    %v1717 = vmul.f32 %v1716, %v1694
    %v1718 = vmul.f32 %v1717, %v1716
    %v1719 = vmul.f32 0.5, %v1718
    %v1720 = vsub.f32 1.5, %v1719
    %v1721 = vmul.f32 %v1716, %v1720
    %vm1722 = vweird.f32 %v1694
    %vm1723 = vweird.f32 %v1716
    %vm1724 = vmor %vm1722, %vm1723
    %v1725 = vsel %vm1724, %v1716, %v1721
    %v1726 = vrsqrt.pop %v1695
    %v1727 = vmul.f32 %v1726, %v1695
    %v1728 = vmul.f32 %v1727, %v1726
    %v1729 = vmul.f32 0.5, %v1728
    %v1730 = vsub.f32 1.5, %v1729
    %v1731 = vmul.f32 %v1726, %v1730
    %vm1732 = vweird.f32 %v1695
    %vm1733 = vweird.f32 %v1726
    %vm1734 = vmor %vm1732, %vm1733
    %v1735 = vsel %vm1734, %v1726, %v1731
    %v1736 = vmul.f32 %v1688, %v1705
    %v1737 = vmul.f32 %v1689, %v1715
    %v1738 = vmul.f32 %v1690, %v1725
    %v1739 = vmul.f32 %v1691, %v1735
    %v1741 = vperm.slane %v1642, 0
    %v1743 = vmul.f32 %v1736, %v1741
    %v1744 = vmul.f32 %v1737, %v1741
    %v1745 = vmul.f32 %v1738, %v1741
    %v1746 = vmul.f32 %v1739, %v1741
    %v1748 = vperm.slane %v1643, 0
    %v1750 = vadd.f32 %v1743, %v1748
    %v1751 = vadd.f32 %v1744, %v1748
    %v1752 = vadd.f32 %v1745, %v1748
    %v1753 = vadd.f32 %v1746, %v1748
    %1754 = vst.msk [vmem:[#allocation2] sm:$0xff] %vm69, %v1750
    %1755 = vst.msk [vmem:[#allocation2 + $0x8] sm:$0xff] %vm69, %v1751
    %1756 = vst.msk [vmem:[#allocation2 + $0x10] sm:$0xff] %vm69, %v1752
    %1757 = vst.msk [vmem:[#allocation2 + $0x18] sm:$0xff] %vm69, %v1753
    // Predicated region
    $region70: #{tpu_custom_call.1} parent=1 // pred_check
      _
    $region71: #{tpu_custom_call.1} parent=1 // pred_check_branch
      %1759 = sbr.rel (0) target = $region73
    $region72: #{tpu_custom_call.1} parent=1 // pred_region
      %1761 = vsyncadd [#allocation3], 0
      %s1762 = sshll.u32 [#allocation2], 4
      %s1763 = int_to_ptr.vmem [resolvable:$true] %s1762
      %s1764 = sshll.u32 %s17, 4
      %s1765 = int_to_ptr.hbm [resolvable:$true] %s1764
      %1770 = dma.vmem_to_hbm [thread:$0]  %s1763, 512, %s1765, [#allocation3], 128, 128, 8
    $region73: #{tpu_custom_call.1} parent=1 // pred_fallthru
      _
    // Predicated region
    $region74: #{tpu_custom_call.1} parent=1 // pred_check
      _
    $region75: #{tpu_custom_call.1} parent=1 // pred_check_branch
      %1772 = sbr.rel (0) target = $region77
    $region76: #{tpu_custom_call.1} parent=1 // pred_region
      %1774 = dma.done [#allocation3], 512
    $region77: #{tpu_custom_call.1} parent=1 // pred_fallthru
      _
    %1775 = vsyncpa [#allocation3], 1

</llo_original>
